<compile_context>
chip_gen: v7x
topology: tpu7x:2x2x1
jax: 0.10.0
libtpu: 0.0.40
codegen_flags: <defaults>
</compile_context>

<pallas_src>
import jax
import jax.numpy as jnp
from jax import lax
from jax.experimental import pallas as pl
from jax.experimental.pallas import tpu as pltpu


def _r8(n):
    """Round up to a multiple of 8 (sublane tile)."""
    return ((n + 7) // 8) * 8


def ops_cell_kernel(
    x_ref, g_ref, a_ref, h0_ref, w_ref, b_ref,      # inputs  (6 DMAs)
    outs_ref, capt_ref,                              # outputs (2 DMAs)
    aproj_scr, blend_scr, gtab_scr,                  # VMEM scratch
):
    T, B, H = outs_ref.shape
    TB, obs = x_ref.shape
    act = a_ref.shape[1]

    # Static row offsets into the packed weight slab (must match wrapper order
    # [wc1 | wc2 | wph | wp2 | wpa]); every block is padded to a multiple of 8
    # rows so each slice below is a clean sublane-aligned load.
    off_wc2 = _r8(obs)
    off_wph = off_wc2 + _r8(H)
    off_wp2 = off_wph + _r8(H)
    off_wpa = off_wp2 + _r8(H)

    wc1 = w_ref[0:obs, :]
    wc2 = w_ref[off_wc2:off_wc2 + H, :]
    wph = w_ref[off_wph:off_wph + H, :]
    wp2 = w_ref[off_wp2:off_wp2 + H, :]
    wpa = w_ref[off_wpa:off_wpa + act, :]

    bc1 = b_ref[0:1, :]
    bc2 = b_ref[1:2, :]
    bp1 = b_ref[2:3, :]
    bp2 = b_ref[3:4, :]

    # ---- h-independent work, batched over all T timesteps (one MXU pass) ----
    # capture(x) = tanh(tanh(x W1 + b1) W2 + b2) on the full (T*B, obs) slab.
    z1 = jnp.tanh(
        jnp.dot(x_ref[...], wc1, preferred_element_type=jnp.float32) + bc1
    )
    z1 = jnp.tanh(jnp.dot(z1, wc2, preferred_element_type=jnp.float32) + bc2)
    capt_ref[...] = z1          # capture output == z1 for every t (one store)

    # Gate table + gated-capture blend base, precomputed for all T so the serial
    # loop has no broadcasts / subtracts on the critical path.
    g_b = jnp.broadcast_to(g_ref[...], (TB, H))        # (TB,1)->(TB,H), once
    gtab_scr[...] = g_b
    blend_scr[...] = (1.0 - g_b) * z1                  # (1-g)*z1

    # predict's action projection a @ Wa + b1, batched over all T.
    aproj_scr[...] = (
        jnp.dot(a_ref[...], wpa, preferred_element_type=jnp.float32) + bp1
    )

    # Loop-invariant hoist: do the (1,H)->(B,H) bias broadcast exactly once.
    bp2_b = jnp.broadcast_to(bp2, (B, H))

    # ---- serial recurrence over T: only the irreducible h-dependent path ----
    def step(t, h_prev):
        row = pl.multiple_of(t * B, 8)                 # B padded to % 8 == 0
        z2 = jnp.tanh(
            jnp.dot(h_prev, wph, preferred_element_type=jnp.float32)
            + aproj_scr[pl.ds(row, B), :]
        )
        z2 = jnp.tanh(jnp.dot(z2, wp2, preferred_element_type=jnp.float32) + bp2_b)
        h_new = blend_scr[pl.ds(row, B), :] + gtab_scr[pl.ds(row, B), :] * z2
        outs_ref[t] = h_new
        return h_new

    # Full unroll only while T is small; bounded unroll avoids vreg spills /
    # instruction-memory blowup for long sequences.
    unroll = True if T <= 16 else 8
    lax.fori_loop(0, T, step, h0_ref[...], unroll=unroll)


def ops_cell_forward(x, h, g, a, params):
    T, B, obs_dim = x.shape
    hidden = h.shape[-1]
    act_dim = a.shape[-1]
    (wc1, bc1, wc2, bc2, wph, wpa, bp1, wp2, bp2) = params

    # Pad batch to a sublane multiple so all per-step pl.ds slices stay aligned.
    B_orig = B
    if B % 8 != 0:
        pad = 8 - B % 8
        x = jnp.pad(x, ((0, 0), (0, pad), (0, 0)))
        g = jnp.pad(g, ((0, 0), (0, pad), (0, 0)))
        a = jnp.pad(a, ((0, 0), (0, pad), (0, 0)))
        h = jnp.pad(h, ((0, 0), (0, pad), (0, 0)))
        B = B + pad

    # Present x / a / g as (T*B, feat) slabs: one big MXU pass for the
    # h-independent matmuls instead of T tiny ones.
    x2 = x.reshape(T * B, obs_dim)
    a2 = a.reshape(T * B, act_dim)
    g2 = g.reshape(T * B, 1)
    h0 = h.reshape(B, hidden)

    # Pack weights (one DMA instead of five); pad each block to a multiple of
    # 8 rows so in-kernel slices are aligned.  Order: [wc1 | wc2 | wph | wp2 | wpa].
    def pad8(w):
        r = w.shape[0]
        pr = _r8(r)
        if pr == r:
            return w
        return jnp.concatenate([w, jnp.zeros((pr - r, w.shape[1]), w.dtype)], 0)

    w_packed = jnp.concatenate(
        [pad8(wc1), pad8(wc2), pad8(wph), pad8(wp2), pad8(wpa)], axis=0
    )
    b_packed = jnp.concatenate([bc1, bc2, bp1, bp2], axis=0)     # (4, hidden)

    def full2(arr):
        return pl.BlockSpec(arr.shape, lambda i: (0, 0))

    grid_spec = pltpu.PrefetchScalarGridSpec(
        num_scalar_prefetch=0,
        grid=(1,),   # single step: everything resident in VMEM, one DMA in/out
        in_specs=[
            full2(x2), full2(g2), full2(a2), full2(h0),
            full2(w_packed), full2(b_packed),
        ],
        out_specs=[
            pl.BlockSpec((T, B, hidden), lambda i: (0, 0, 0)),   # outs
            pl.BlockSpec((T * B, hidden), lambda i: (0, 0)),     # capt
        ],
        scratch_shapes=[
            pltpu.VMEM((T * B, hidden), jnp.float32),   # a-projection table
            pltpu.VMEM((T * B, hidden), jnp.float32),   # (1-g)*z1 blend base
            pltpu.VMEM((T * B, hidden), jnp.float32),   # g broadcast table
        ],
    )

    outs, capt = pl.pallas_call(
        ops_cell_kernel,
        out_shape=(
            jax.ShapeDtypeStruct((T, B, hidden), jnp.float32),
            jax.ShapeDtypeStruct((T * B, hidden), jnp.float32),
        ),
        grid_spec=grid_spec,
        compiler_params=pltpu.CompilerParams(
            dimension_semantics=("arbitrary",),
            # Tiny working set here; kept as an explicit knob for scaled-up
            # deployments (v7x has only 64 MiB physical / 32 MiB scoped VMEM —
            # at larger T*B*H switch to a T-chunked grid).
            vmem_limit_bytes=32 * 1024 * 1024,
        ),
    )(x2, g2, a2, h0, w_packed, b_packed)

    if B != B_orig:
        outs = outs[:, :B_orig, :]
        capt = capt.reshape(T, B, hidden)[:, :B_orig, :].reshape(T * B_orig, hidden)

    # Final hidden state equals the last row of outs — no separate kernel output.
    h_last = outs[-1:]
    return outs, h_last, capt


def orthogonal(key, shape, gain=1.0):
    """Deterministic orthogonal init (analog of nn.init.orthogonal_)."""
    rows, cols = shape
    n = max(rows, cols)
    m = jax.random.normal(key, (n, n), dtype=jnp.float32)
    q, r = jnp.linalg.qr(m)
    q = q * jnp.sign(jnp.diagonal(r))
    return (gain * q[:rows, :cols]).astype(jnp.float32)


def make_params(key, obs_dim, act_dim, hidden):
    ks = jax.random.split(key, 4)
    g2 = float(jnp.sqrt(2.0))
    # capture: init_(...) -> orthogonal gain sqrt(2), bias 0
    wc1 = orthogonal(ks[0], (obs_dim, hidden), gain=g2)
    bc1 = jnp.zeros((1, hidden), jnp.float32)
    wc2 = orthogonal(ks[1], (hidden, hidden), gain=g2)
    bc2 = jnp.zeros((1, hidden), jnp.float32)
    # predict: re-initialized in OpsCell.__init__ with orthogonal gain 1, bias 0
    wp1 = orthogonal(ks[2], (hidden + act_dim, hidden), gain=1.0)
    wph = wp1[:hidden, :]       # applied to h  (the cat([h, a]) split)
    wpa = wp1[hidden:, :]       # applied to a
    bp1 = jnp.zeros((1, hidden), jnp.float32)
    wp2 = orthogonal(ks[3], (hidden, hidden), gain=1.0)
    bp2 = jnp.zeros((1, hidden), jnp.float32)
    return (wc1, bc1, wc2, bc2, wph, wpa, bp1, wp2, bp2)


def reference_forward(x, h, g, a, params):
    (wc1, bc1, wc2, bc2, wph, wpa, bp1, wp2, bp2) = params
    T = x.shape[0]
    hcur = h[0]
    outs, capt = [], []
    for t in range(T):
        z1 = jnp.tanh(jnp.tanh(x[t] @ wc1 + bc1) @ wc2 + bc2)
        z2 = jnp.tanh(jnp.tanh(hcur @ wph + a[t] @ wpa + bp1) @ wp2 + bp2)
        hcur = (1.0 - g[t]) * z1 + g[t] * z2
        outs.append(hcur[None])
        capt.append(z1)
    return jnp.concatenate(outs, 0), hcur[None], jnp.concatenate(capt, 0)


if __name__ == "__main__":
    T, B = 8, 8
    obs_dim, act_dim, hidden = 16, 4, 32

    key = jax.random.PRNGKey(0)
    k_x, k_h, k_g, k_a, k_p = jax.random.split(key, 5)

    x = jax.random.normal(k_x, (T, B, obs_dim), dtype=jnp.float32)
    h0 = jax.random.normal(k_h, (1, B, hidden), dtype=jnp.float32)
    g = jax.random.uniform(k_g, (T, B, 1), dtype=jnp.float32)
    a = jax.random.normal(k_a, (T, B, act_dim), dtype=jnp.float32)

    params = make_params(k_p, obs_dim, act_dim, hidden)

    outs, h_last, capt = jax.block_until_ready(ops_cell_forward(x, h0, g, a, params))

    # sanity check vs. pure-JAX reference
    ro, rh, rc = reference_forward(x, h0, g, a, params)
    assert outs.shape == (T, B, hidden)
    assert h_last.shape == (1, B, hidden)
    assert capt.shape == (T * B, hidden)
    assert jnp.allclose(outs, ro, atol=1e-5)
    assert jnp.allclose(h_last, rh, atol=1e-5)
    assert jnp.allclose(capt, rc, atol=1e-5)

    print("KERNEL_OK")
</pallas_src>

<mosaic_0001>
module attributes {stable_mosaic.version = 11 : i64} {
  func.func @ops_cell_kernel(%arg0: i32, %arg1: memref<64x16xf32, #tpu.memory_space<vmem>>, %arg2: memref<64x1xf32, #tpu.memory_space<vmem>>, %arg3: memref<64x4xf32, #tpu.memory_space<vmem>>, %arg4: memref<8x32xf32, #tpu.memory_space<vmem>>, %arg5: memref<120x32xf32, #tpu.memory_space<vmem>>, %arg6: memref<4x32xf32, #tpu.memory_space<vmem>>, %arg7: memref<8x8x32xf32, #tpu.memory_space<vmem>>, %arg8: memref<64x32xf32, #tpu.memory_space<vmem>>, %arg9: memref<64x32xf32, #tpu.memory_space<vmem>>, %arg10: memref<64x32xf32, #tpu.memory_space<vmem>>, %arg11: memref<64x32xf32, #tpu.memory_space<vmem>>) attributes {dimension_semantics = [#tpu.dimension_semantics<arbitrary>], iteration_bounds = array<i64: 1>, scalar_prefetch = 0 : i64, scratch_operands = 3 : i64, tpu.core_type = #tpu.core_type<tc>, window_params = [{pipeline_mode = #tpu.pipeline_mode<synchronous>, transform_indices = @transform_0, window_bounds = array<i64: 64, 16>}, {pipeline_mode = #tpu.pipeline_mode<synchronous>, transform_indices = @transform_1, window_bounds = array<i64: 64, 1>}, {pipeline_mode = #tpu.pipeline_mode<synchronous>, transform_indices = @transform_2, window_bounds = array<i64: 64, 4>}, {pipeline_mode = #tpu.pipeline_mode<synchronous>, transform_indices = @transform_3, window_bounds = array<i64: 8, 32>}, {pipeline_mode = #tpu.pipeline_mode<synchronous>, transform_indices = @transform_4, window_bounds = array<i64: 120, 32>}, {pipeline_mode = #tpu.pipeline_mode<synchronous>, transform_indices = @transform_5, window_bounds = array<i64: 4, 32>}, {pipeline_mode = #tpu.pipeline_mode<synchronous>, transform_indices = @transform_6, window_bounds = array<i64: 8, 8, 32>}, {pipeline_mode = #tpu.pipeline_mode<synchronous>, transform_indices = @transform_7, window_bounds = array<i64: 64, 32>}]} {
    %c0 = arith.constant 0 : index
    %c0_0 = arith.constant 0 : index
    %0 = vector.load %arg5[%c0, %c0_0] : memref<120x32xf32, #tpu.memory_space<vmem>>, vector<16x32xf32>
    %c16 = arith.constant 16 : index
    %c0_1 = arith.constant 0 : index
    %1 = vector.load %arg5[%c16, %c0_1] : memref<120x32xf32, #tpu.memory_space<vmem>>, vector<32x32xf32>
    %c48 = arith.constant 48 : index
    %c0_2 = arith.constant 0 : index
    %2 = vector.load %arg5[%c48, %c0_2] : memref<120x32xf32, #tpu.memory_space<vmem>>, vector<32x32xf32>
    %c80 = arith.constant 80 : index
    %c0_3 = arith.constant 0 : index
    %3 = vector.load %arg5[%c80, %c0_3] : memref<120x32xf32, #tpu.memory_space<vmem>>, vector<32x32xf32>
    %c112 = arith.constant 112 : index
    %c0_4 = arith.constant 0 : index
    %4 = vector.load %arg5[%c112, %c0_4] : memref<120x32xf32, #tpu.memory_space<vmem>>, vector<4x32xf32>
    %c0_5 = arith.constant 0 : index
    %c0_6 = arith.constant 0 : index
    %5 = vector.load %arg6[%c0_5, %c0_6] : memref<4x32xf32, #tpu.memory_space<vmem>>, vector<1x32xf32>
    %c1 = arith.constant 1 : index
    %c0_7 = arith.constant 0 : index
    %6 = vector.load %arg6[%c1, %c0_7] : memref<4x32xf32, #tpu.memory_space<vmem>>, vector<1x32xf32>
    %c2 = arith.constant 2 : index
    %c0_8 = arith.constant 0 : index
    %7 = vector.load %arg6[%c2, %c0_8] : memref<4x32xf32, #tpu.memory_space<vmem>>, vector<1x32xf32>
    %c3 = arith.constant 3 : index
    %c0_9 = arith.constant 0 : index
    %8 = vector.load %arg6[%c3, %c0_9] : memref<4x32xf32, #tpu.memory_space<vmem>>, vector<1x32xf32>
    %c0_10 = arith.constant 0 : index
    %c0_11 = arith.constant 0 : index
    %9 = vector.load %arg1[%c0_10, %c0_11] : memref<64x16xf32, #tpu.memory_space<vmem>>, vector<64x16xf32>
    %cst = arith.constant dense<0.000000e+00> : vector<64x32xf32>
    %10 = tpu.matmul %9, %0, %cst {dimension_numbers = #tpu.dot_dimension_numbers<[1], [0], [0], [1], [0, 0, 1, 1], [], []>} : vector<64x16xf32>, vector<16x32xf32>, vector<64x32xf32> -> vector<64x32xf32>
    %11 = vector.broadcast %5 : vector<1x32xf32> to vector<64x32xf32>
    %12 = arith.addf %10, %11 : vector<64x32xf32>
    %13 = math.tanh %12 : vector<64x32xf32>
    %cst_12 = arith.constant dense<0.000000e+00> : vector<64x32xf32>
    %14 = tpu.matmul %13, %1, %cst_12 {dimension_numbers = #tpu.dot_dimension_numbers<[1], [0], [0], [1], [0, 0, 1, 1], [], []>} : vector<64x32xf32>, vector<32x32xf32>, vector<64x32xf32> -> vector<64x32xf32>
    %15 = vector.broadcast %6 : vector<1x32xf32> to vector<64x32xf32>
    %16 = arith.addf %14, %15 : vector<64x32xf32>
    %17 = math.tanh %16 : vector<64x32xf32>
    %c0_13 = arith.constant 0 : index
    %c0_14 = arith.constant 0 : index
    %18 = vector.load %arg8[%c0_13, %c0_14] : memref<64x32xf32, #tpu.memory_space<vmem>>, vector<64x32xf32>
    tpu.vector_store %arg8[%c0_13, %c0_14], %17 {strides = array<i32>} : memref<64x32xf32, #tpu.memory_space<vmem>>, vector<64x32xf32>,
    %c0_15 = arith.constant 0 : index
    %c0_16 = arith.constant 0 : index
    %19 = vector.load %arg2[%c0_15, %c0_16] : memref<64x1xf32, #tpu.memory_space<vmem>>, vector<64x1xf32>
    %20 = vector.shape_cast %19 : vector<64x1xf32> to vector<64x1xf32>
    %21 = vector.broadcast %20 : vector<64x1xf32> to vector<64x32xf32>
    %c0_17 = arith.constant 0 : index
    %c0_18 = arith.constant 0 : index
    %22 = vector.load %arg11[%c0_17, %c0_18] : memref<64x32xf32, #tpu.memory_space<vmem>>, vector<64x32xf32>
    tpu.vector_store %arg11[%c0_17, %c0_18], %21 {strides = array<i32>} : memref<64x32xf32, #tpu.memory_space<vmem>>, vector<64x32xf32>,
    %cst_19 = arith.constant 1.000000e+00 : f32
    %23 = vector.broadcast %cst_19 : f32 to vector<64x32xf32>
    %24 = arith.subf %23, %21 : vector<64x32xf32>
    %25 = arith.mulf %24, %17 : vector<64x32xf32>
    %c0_20 = arith.constant 0 : index
    %c0_21 = arith.constant 0 : index
    %26 = vector.load %arg10[%c0_20, %c0_21] : memref<64x32xf32, #tpu.memory_space<vmem>>, vector<64x32xf32>
    tpu.vector_store %arg10[%c0_20, %c0_21], %25 {strides = array<i32>} : memref<64x32xf32, #tpu.memory_space<vmem>>, vector<64x32xf32>,
    %c0_22 = arith.constant 0 : index
    %c0_23 = arith.constant 0 : index
    %27 = vector.load %arg3[%c0_22, %c0_23] : memref<64x4xf32, #tpu.memory_space<vmem>>, vector<64x4xf32>
    %cst_24 = arith.constant dense<0.000000e+00> : vector<64x32xf32>
    %28 = tpu.matmul %27, %4, %cst_24 {dimension_numbers = #tpu.dot_dimension_numbers<[1], [0], [0], [1], [0, 0, 1, 1], [], []>} : vector<64x4xf32>, vector<4x32xf32>, vector<64x32xf32> -> vector<64x32xf32>
    %29 = vector.broadcast %7 : vector<1x32xf32> to vector<64x32xf32>
    %30 = arith.addf %28, %29 : vector<64x32xf32>
    %c0_25 = arith.constant 0 : index
    %c0_26 = arith.constant 0 : index
    %31 = vector.load %arg9[%c0_25, %c0_26] : memref<64x32xf32, #tpu.memory_space<vmem>>, vector<64x32xf32>
    tpu.vector_store %arg9[%c0_25, %c0_26], %30 {strides = array<i32>} : memref<64x32xf32, #tpu.memory_space<vmem>>, vector<64x32xf32>,
    %32 = vector.shape_cast %8 : vector<1x32xf32> to vector<1x32xf32>
    %33 = vector.broadcast %32 : vector<1x32xf32> to vector<8x32xf32>
    %c0_27 = arith.constant 0 : index
    %c0_28 = arith.constant 0 : index
    %34 = vector.load %arg4[%c0_27, %c0_28] : memref<8x32xf32, #tpu.memory_space<vmem>>, vector<8x32xf32>
    %c0_i32 = arith.constant 0 : i32
    %c8_i32 = arith.constant 8 : i32
    %35 = arith.muli %c0_i32, %c8_i32 : i32
    %36 = tpu.assume_multiple %35, 8 : i32
    %cst_29 = arith.constant dense<0.000000e+00> : vector<8x32xf32>
    %37 = tpu.matmul %34, %2, %cst_29 {dimension_numbers = #tpu.dot_dimension_numbers<[1], [0], [0], [1], [0, 0, 1, 1], [], []>} : vector<8x32xf32>, vector<32x32xf32>, vector<8x32xf32> -> vector<8x32xf32>
    %38 = arith.index_cast %36 : i32 to index
    %c0_30 = arith.constant 0 : index
    %39 = vector.load %arg9[%38, %c0_30] : memref<64x32xf32, #tpu.memory_space<vmem>>, vector<8x32xf32>
    %40 = arith.addf %37, %39 : vector<8x32xf32>
    %41 = math.tanh %40 : vector<8x32xf32>
    %cst_31 = arith.constant dense<0.000000e+00> : vector<8x32xf32>
    %42 = tpu.matmul %41, %3, %cst_31 {dimension_numbers = #tpu.dot_dimension_numbers<[1], [0], [0], [1], [0, 0, 1, 1], [], []>} : vector<8x32xf32>, vector<32x32xf32>, vector<8x32xf32> -> vector<8x32xf32>
    %43 = arith.addf %42, %33 : vector<8x32xf32>
    %44 = math.tanh %43 : vector<8x32xf32>
    %45 = arith.index_cast %36 : i32 to index
    %c0_32 = arith.constant 0 : index
    %46 = vector.load %arg10[%45, %c0_32] : memref<64x32xf32, #tpu.memory_space<vmem>>, vector<8x32xf32>
    %47 = arith.index_cast %36 : i32 to index
    %c0_33 = arith.constant 0 : index
    %48 = vector.load %arg11[%47, %c0_33] : memref<64x32xf32, #tpu.memory_space<vmem>>, vector<8x32xf32>
    %49 = arith.mulf %48, %44 : vector<8x32xf32>
    %50 = arith.addf %46, %49 : vector<8x32xf32>
    %51 = arith.index_cast %c0_i32 : i32 to index
    %c0_34 = arith.constant 0 : index
    %c0_35 = arith.constant 0 : index
    %52 = vector.load %arg7[%51, %c0_34, %c0_35] : memref<8x8x32xf32, #tpu.memory_space<vmem>>, vector<1x8x32xf32>
    %53 = vector.shape_cast %52 : vector<1x8x32xf32> to vector<8x32xf32>
    %54 = vector.shape_cast %50 : vector<8x32xf32> to vector<1x8x32xf32>
    tpu.vector_store %arg7[%51, %c0_34, %c0_35], %54 {strides = array<i32>} : memref<8x8x32xf32, #tpu.memory_space<vmem>>, vector<1x8x32xf32>,
    %c1_i32 = arith.constant 1 : i32
    %c8_i32_36 = arith.constant 8 : i32
    %55 = arith.muli %c1_i32, %c8_i32_36 : i32
    %56 = tpu.assume_multiple %55, 8 : i32
    %cst_37 = arith.constant dense<0.000000e+00> : vector<8x32xf32>
    %57 = tpu.matmul %50, %2, %cst_37 {dimension_numbers = #tpu.dot_dimension_numbers<[1], [0], [0], [1], [0, 0, 1, 1], [], []>} : vector<8x32xf32>, vector<32x32xf32>, vector<8x32xf32> -> vector<8x32xf32>
    %58 = arith.index_cast %56 : i32 to index
    %c0_38 = arith.constant 0 : index
    %59 = vector.load %arg9[%58, %c0_38] : memref<64x32xf32, #tpu.memory_space<vmem>>, vector<8x32xf32>
    %60 = arith.addf %57, %59 : vector<8x32xf32>
    %61 = math.tanh %60 : vector<8x32xf32>
    %cst_39 = arith.constant dense<0.000000e+00> : vector<8x32xf32>
    %62 = tpu.matmul %61, %3, %cst_39 {dimension_numbers = #tpu.dot_dimension_numbers<[1], [0], [0], [1], [0, 0, 1, 1], [], []>} : vector<8x32xf32>, vector<32x32xf32>, vector<8x32xf32> -> vector<8x32xf32>
    %63 = arith.addf %62, %33 : vector<8x32xf32>
    %64 = math.tanh %63 : vector<8x32xf32>
    %65 = arith.index_cast %56 : i32 to index
    %c0_40 = arith.constant 0 : index
    %66 = vector.load %arg10[%65, %c0_40] : memref<64x32xf32, #tpu.memory_space<vmem>>, vector<8x32xf32>
    %67 = arith.index_cast %56 : i32 to index
    %c0_41 = arith.constant 0 : index
    %68 = vector.load %arg11[%67, %c0_41] : memref<64x32xf32, #tpu.memory_space<vmem>>, vector<8x32xf32>
    %69 = arith.mulf %68, %64 : vector<8x32xf32>
    %70 = arith.addf %66, %69 : vector<8x32xf32>
    %71 = arith.index_cast %c1_i32 : i32 to index
    %c0_42 = arith.constant 0 : index
    %c0_43 = arith.constant 0 : index
    %72 = vector.load %arg7[%71, %c0_42, %c0_43] : memref<8x8x32xf32, #tpu.memory_space<vmem>>, vector<1x8x32xf32>
    %73 = vector.shape_cast %72 : vector<1x8x32xf32> to vector<8x32xf32>
    %74 = vector.shape_cast %70 : vector<8x32xf32> to vector<1x8x32xf32>
    tpu.vector_store %arg7[%71, %c0_42, %c0_43], %74 {strides = array<i32>} : memref<8x8x32xf32, #tpu.memory_space<vmem>>, vector<1x8x32xf32>,
    %c2_i32 = arith.constant 2 : i32
    %c8_i32_44 = arith.constant 8 : i32
    %75 = arith.muli %c2_i32, %c8_i32_44 : i32
    %76 = tpu.assume_multiple %75, 8 : i32
    %cst_45 = arith.constant dense<0.000000e+00> : vector<8x32xf32>
    %77 = tpu.matmul %70, %2, %cst_45 {dimension_numbers = #tpu.dot_dimension_numbers<[1], [0], [0], [1], [0, 0, 1, 1], [], []>} : vector<8x32xf32>, vector<32x32xf32>, vector<8x32xf32> -> vector<8x32xf32>
    %78 = arith.index_cast %76 : i32 to index
    %c0_46 = arith.constant 0 : index
    %79 = vector.load %arg9[%78, %c0_46] : memref<64x32xf32, #tpu.memory_space<vmem>>, vector<8x32xf32>
    %80 = arith.addf %77, %79 : vector<8x32xf32>
    %81 = math.tanh %80 : vector<8x32xf32>
    %cst_47 = arith.constant dense<0.000000e+00> : vector<8x32xf32>
    %82 = tpu.matmul %81, %3, %cst_47 {dimension_numbers = #tpu.dot_dimension_numbers<[1], [0], [0], [1], [0, 0, 1, 1], [], []>} : vector<8x32xf32>, vector<32x32xf32>, vector<8x32xf32> -> vector<8x32xf32>
    %83 = arith.addf %82, %33 : vector<8x32xf32>
    %84 = math.tanh %83 : vector<8x32xf32>
    %85 = arith.index_cast %76 : i32 to index
    %c0_48 = arith.constant 0 : index
    %86 = vector.load %arg10[%85, %c0_48] : memref<64x32xf32, #tpu.memory_space<vmem>>, vector<8x32xf32>
    %87 = arith.index_cast %76 : i32 to index
    %c0_49 = arith.constant 0 : index
    %88 = vector.load %arg11[%87, %c0_49] : memref<64x32xf32, #tpu.memory_space<vmem>>, vector<8x32xf32>
    %89 = arith.mulf %88, %84 : vector<8x32xf32>
    %90 = arith.addf %86, %89 : vector<8x32xf32>
    %91 = arith.index_cast %c2_i32 : i32 to index
    %c0_50 = arith.constant 0 : index
    %c0_51 = arith.constant 0 : index
    %92 = vector.load %arg7[%91, %c0_50, %c0_51] : memref<8x8x32xf32, #tpu.memory_space<vmem>>, vector<1x8x32xf32>
    %93 = vector.shape_cast %92 : vector<1x8x32xf32> to vector<8x32xf32>
    %94 = vector.shape_cast %90 : vector<8x32xf32> to vector<1x8x32xf32>
    tpu.vector_store %arg7[%91, %c0_50, %c0_51], %94 {strides = array<i32>} : memref<8x8x32xf32, #tpu.memory_space<vmem>>, vector<1x8x32xf32>,
    %c3_i32 = arith.constant 3 : i32
    %c8_i32_52 = arith.constant 8 : i32
    %95 = arith.muli %c3_i32, %c8_i32_52 : i32
    %96 = tpu.assume_multiple %95, 8 : i32
    %cst_53 = arith.constant dense<0.000000e+00> : vector<8x32xf32>
    %97 = tpu.matmul %90, %2, %cst_53 {dimension_numbers = #tpu.dot_dimension_numbers<[1], [0], [0], [1], [0, 0, 1, 1], [], []>} : vector<8x32xf32>, vector<32x32xf32>, vector<8x32xf32> -> vector<8x32xf32>
    %98 = arith.index_cast %96 : i32 to index
    %c0_54 = arith.constant 0 : index
    %99 = vector.load %arg9[%98, %c0_54] : memref<64x32xf32, #tpu.memory_space<vmem>>, vector<8x32xf32>
    %100 = arith.addf %97, %99 : vector<8x32xf32>
    %101 = math.tanh %100 : vector<8x32xf32>
    %cst_55 = arith.constant dense<0.000000e+00> : vector<8x32xf32>
    %102 = tpu.matmul %101, %3, %cst_55 {dimension_numbers = #tpu.dot_dimension_numbers<[1], [0], [0], [1], [0, 0, 1, 1], [], []>} : vector<8x32xf32>, vector<32x32xf32>, vector<8x32xf32> -> vector<8x32xf32>
    %103 = arith.addf %102, %33 : vector<8x32xf32>
    %104 = math.tanh %103 : vector<8x32xf32>
    %105 = arith.index_cast %96 : i32 to index
    %c0_56 = arith.constant 0 : index
    %106 = vector.load %arg10[%105, %c0_56] : memref<64x32xf32, #tpu.memory_space<vmem>>, vector<8x32xf32>
    %107 = arith.index_cast %96 : i32 to index
    %c0_57 = arith.constant 0 : index
    %108 = vector.load %arg11[%107, %c0_57] : memref<64x32xf32, #tpu.memory_space<vmem>>, vector<8x32xf32>
    %109 = arith.mulf %108, %104 : vector<8x32xf32>
    %110 = arith.addf %106, %109 : vector<8x32xf32>
    %111 = arith.index_cast %c3_i32 : i32 to index
    %c0_58 = arith.constant 0 : index
    %c0_59 = arith.constant 0 : index
    %112 = vector.load %arg7[%111, %c0_58, %c0_59] : memref<8x8x32xf32, #tpu.memory_space<vmem>>, vector<1x8x32xf32>
    %113 = vector.shape_cast %112 : vector<1x8x32xf32> to vector<8x32xf32>
    %114 = vector.shape_cast %110 : vector<8x32xf32> to vector<1x8x32xf32>
    tpu.vector_store %arg7[%111, %c0_58, %c0_59], %114 {strides = array<i32>} : memref<8x8x32xf32, #tpu.memory_space<vmem>>, vector<1x8x32xf32>,
    %c4_i32 = arith.constant 4 : i32
    %c8_i32_60 = arith.constant 8 : i32
    %115 = arith.muli %c4_i32, %c8_i32_60 : i32
    %116 = tpu.assume_multiple %115, 8 : i32
    %cst_61 = arith.constant dense<0.000000e+00> : vector<8x32xf32>
    %117 = tpu.matmul %110, %2, %cst_61 {dimension_numbers = #tpu.dot_dimension_numbers<[1], [0], [0], [1], [0, 0, 1, 1], [], []>} : vector<8x32xf32>, vector<32x32xf32>, vector<8x32xf32> -> vector<8x32xf32>
    %118 = arith.index_cast %116 : i32 to index
    %c0_62 = arith.constant 0 : index
    %119 = vector.load %arg9[%118, %c0_62] : memref<64x32xf32, #tpu.memory_space<vmem>>, vector<8x32xf32>
    %120 = arith.addf %117, %119 : vector<8x32xf32>
    %121 = math.tanh %120 : vector<8x32xf32>
    %cst_63 = arith.constant dense<0.000000e+00> : vector<8x32xf32>
    %122 = tpu.matmul %121, %3, %cst_63 {dimension_numbers = #tpu.dot_dimension_numbers<[1], [0], [0], [1], [0, 0, 1, 1], [], []>} : vector<8x32xf32>, vector<32x32xf32>, vector<8x32xf32> -> vector<8x32xf32>
    %123 = arith.addf %122, %33 : vector<8x32xf32>
    %124 = math.tanh %123 : vector<8x32xf32>
    %125 = arith.index_cast %116 : i32 to index
    %c0_64 = arith.constant 0 : index
    %126 = vector.load %arg10[%125, %c0_64] : memref<64x32xf32, #tpu.memory_space<vmem>>, vector<8x32xf32>
    %127 = arith.index_cast %116 : i32 to index
    %c0_65 = arith.constant 0 : index
    %128 = vector.load %arg11[%127, %c0_65] : memref<64x32xf32, #tpu.memory_space<vmem>>, vector<8x32xf32>
    %129 = arith.mulf %128, %124 : vector<8x32xf32>
    %130 = arith.addf %126, %129 : vector<8x32xf32>
    %131 = arith.index_cast %c4_i32 : i32 to index
    %c0_66 = arith.constant 0 : index
    %c0_67 = arith.constant 0 : index
    %132 = vector.load %arg7[%131, %c0_66, %c0_67] : memref<8x8x32xf32, #tpu.memory_space<vmem>>, vector<1x8x32xf32>
    %133 = vector.shape_cast %132 : vector<1x8x32xf32> to vector<8x32xf32>
    %134 = vector.shape_cast %130 : vector<8x32xf32> to vector<1x8x32xf32>
    tpu.vector_store %arg7[%131, %c0_66, %c0_67], %134 {strides = array<i32>} : memref<8x8x32xf32, #tpu.memory_space<vmem>>, vector<1x8x32xf32>,
    %c5_i32 = arith.constant 5 : i32
    %c8_i32_68 = arith.constant 8 : i32
    %135 = arith.muli %c5_i32, %c8_i32_68 : i32
    %136 = tpu.assume_multiple %135, 8 : i32
    %cst_69 = arith.constant dense<0.000000e+00> : vector<8x32xf32>
    %137 = tpu.matmul %130, %2, %cst_69 {dimension_numbers = #tpu.dot_dimension_numbers<[1], [0], [0], [1], [0, 0, 1, 1], [], []>} : vector<8x32xf32>, vector<32x32xf32>, vector<8x32xf32> -> vector<8x32xf32>
    %138 = arith.index_cast %136 : i32 to index
    %c0_70 = arith.constant 0 : index
    %139 = vector.load %arg9[%138, %c0_70] : memref<64x32xf32, #tpu.memory_space<vmem>>, vector<8x32xf32>
    %140 = arith.addf %137, %139 : vector<8x32xf32>
    %141 = math.tanh %140 : vector<8x32xf32>
    %cst_71 = arith.constant dense<0.000000e+00> : vector<8x32xf32>
    %142 = tpu.matmul %141, %3, %cst_71 {dimension_numbers = #tpu.dot_dimension_numbers<[1], [0], [0], [1], [0, 0, 1, 1], [], []>} : vector<8x32xf32>, vector<32x32xf32>, vector<8x32xf32> -> vector<8x32xf32>
    %143 = arith.addf %142, %33 : vector<8x32xf32>
    %144 = math.tanh %143 : vector<8x32xf32>
    %145 = arith.index_cast %136 : i32 to index
    %c0_72 = arith.constant 0 : index
    %146 = vector.load %arg10[%145, %c0_72] : memref<64x32xf32, #tpu.memory_space<vmem>>, vector<8x32xf32>
    %147 = arith.index_cast %136 : i32 to index
    %c0_73 = arith.constant 0 : index
    %148 = vector.load %arg11[%147, %c0_73] : memref<64x32xf32, #tpu.memory_space<vmem>>, vector<8x32xf32>
    %149 = arith.mulf %148, %144 : vector<8x32xf32>
    %150 = arith.addf %146, %149 : vector<8x32xf32>
    %151 = arith.index_cast %c5_i32 : i32 to index
    %c0_74 = arith.constant 0 : index
    %c0_75 = arith.constant 0 : index
    %152 = vector.load %arg7[%151, %c0_74, %c0_75] : memref<8x8x32xf32, #tpu.memory_space<vmem>>, vector<1x8x32xf32>
    %153 = vector.shape_cast %152 : vector<1x8x32xf32> to vector<8x32xf32>
    %154 = vector.shape_cast %150 : vector<8x32xf32> to vector<1x8x32xf32>
    tpu.vector_store %arg7[%151, %c0_74, %c0_75], %154 {strides = array<i32>} : memref<8x8x32xf32, #tpu.memory_space<vmem>>, vector<1x8x32xf32>,
    %c6_i32 = arith.constant 6 : i32
    %c8_i32_76 = arith.constant 8 : i32
    %155 = arith.muli %c6_i32, %c8_i32_76 : i32
    %156 = tpu.assume_multiple %155, 8 : i32
    %cst_77 = arith.constant dense<0.000000e+00> : vector<8x32xf32>
    %157 = tpu.matmul %150, %2, %cst_77 {dimension_numbers = #tpu.dot_dimension_numbers<[1], [0], [0], [1], [0, 0, 1, 1], [], []>} : vector<8x32xf32>, vector<32x32xf32>, vector<8x32xf32> -> vector<8x32xf32>
    %158 = arith.index_cast %156 : i32 to index
    %c0_78 = arith.constant 0 : index
    %159 = vector.load %arg9[%158, %c0_78] : memref<64x32xf32, #tpu.memory_space<vmem>>, vector<8x32xf32>
    %160 = arith.addf %157, %159 : vector<8x32xf32>
    %161 = math.tanh %160 : vector<8x32xf32>
    %cst_79 = arith.constant dense<0.000000e+00> : vector<8x32xf32>
    %162 = tpu.matmul %161, %3, %cst_79 {dimension_numbers = #tpu.dot_dimension_numbers<[1], [0], [0], [1], [0, 0, 1, 1], [], []>} : vector<8x32xf32>, vector<32x32xf32>, vector<8x32xf32> -> vector<8x32xf32>
    %163 = arith.addf %162, %33 : vector<8x32xf32>
    %164 = math.tanh %163 : vector<8x32xf32>
    %165 = arith.index_cast %156 : i32 to index
    %c0_80 = arith.constant 0 : index
    %166 = vector.load %arg10[%165, %c0_80] : memref<64x32xf32, #tpu.memory_space<vmem>>, vector<8x32xf32>
    %167 = arith.index_cast %156 : i32 to index
    %c0_81 = arith.constant 0 : index
    %168 = vector.load %arg11[%167, %c0_81] : memref<64x32xf32, #tpu.memory_space<vmem>>, vector<8x32xf32>
    %169 = arith.mulf %168, %164 : vector<8x32xf32>
    %170 = arith.addf %166, %169 : vector<8x32xf32>
    %171 = arith.index_cast %c6_i32 : i32 to index
    %c0_82 = arith.constant 0 : index
    %c0_83 = arith.constant 0 : index
    %172 = vector.load %arg7[%171, %c0_82, %c0_83] : memref<8x8x32xf32, #tpu.memory_space<vmem>>, vector<1x8x32xf32>
    %173 = vector.shape_cast %172 : vector<1x8x32xf32> to vector<8x32xf32>
    %174 = vector.shape_cast %170 : vector<8x32xf32> to vector<1x8x32xf32>
    tpu.vector_store %arg7[%171, %c0_82, %c0_83], %174 {strides = array<i32>} : memref<8x8x32xf32, #tpu.memory_space<vmem>>, vector<1x8x32xf32>,
    %c7_i32 = arith.constant 7 : i32
    %c8_i32_84 = arith.constant 8 : i32
    %175 = arith.muli %c7_i32, %c8_i32_84 : i32
    %176 = tpu.assume_multiple %175, 8 : i32
    %cst_85 = arith.constant dense<0.000000e+00> : vector<8x32xf32>
    %177 = tpu.matmul %170, %2, %cst_85 {dimension_numbers = #tpu.dot_dimension_numbers<[1], [0], [0], [1], [0, 0, 1, 1], [], []>} : vector<8x32xf32>, vector<32x32xf32>, vector<8x32xf32> -> vector<8x32xf32>
    %178 = arith.index_cast %176 : i32 to index
    %c0_86 = arith.constant 0 : index
    %179 = vector.load %arg9[%178, %c0_86] : memref<64x32xf32, #tpu.memory_space<vmem>>, vector<8x32xf32>
    %180 = arith.addf %177, %179 : vector<8x32xf32>
    %181 = math.tanh %180 : vector<8x32xf32>
    %cst_87 = arith.constant dense<0.000000e+00> : vector<8x32xf32>
    %182 = tpu.matmul %181, %3, %cst_87 {dimension_numbers = #tpu.dot_dimension_numbers<[1], [0], [0], [1], [0, 0, 1, 1], [], []>} : vector<8x32xf32>, vector<32x32xf32>, vector<8x32xf32> -> vector<8x32xf32>
    %183 = arith.addf %182, %33 : vector<8x32xf32>
    %184 = math.tanh %183 : vector<8x32xf32>
    %185 = arith.index_cast %176 : i32 to index
    %c0_88 = arith.constant 0 : index
    %186 = vector.load %arg10[%185, %c0_88] : memref<64x32xf32, #tpu.memory_space<vmem>>, vector<8x32xf32>
    %187 = arith.index_cast %176 : i32 to index
    %c0_89 = arith.constant 0 : index
    %188 = vector.load %arg11[%187, %c0_89] : memref<64x32xf32, #tpu.memory_space<vmem>>, vector<8x32xf32>
    %189 = arith.mulf %188, %184 : vector<8x32xf32>
    %190 = arith.addf %186, %189 : vector<8x32xf32>
    %191 = arith.index_cast %c7_i32 : i32 to index
    %c0_90 = arith.constant 0 : index
    %c0_91 = arith.constant 0 : index
    %192 = vector.load %arg7[%191, %c0_90, %c0_91] : memref<8x8x32xf32, #tpu.memory_space<vmem>>, vector<1x8x32xf32>
    %193 = vector.shape_cast %192 : vector<1x8x32xf32> to vector<8x32xf32>
    %194 = vector.shape_cast %190 : vector<8x32xf32> to vector<1x8x32xf32>
    tpu.vector_store %arg7[%191, %c0_90, %c0_91], %194 {strides = array<i32>} : memref<8x8x32xf32, #tpu.memory_space<vmem>>, vector<1x8x32xf32>,
    %c8_i32_92 = arith.constant 8 : i32
    return
  }
  func.func @transform_0(%arg0: i32) -> (i32, i32) {
    %c0_i32 = arith.constant 0 : i32
    %c0_i32_0 = arith.constant 0 : i32
    %c0_i32_1 = arith.constant 0 : i32
    return %c0_i32, %c0_i32_0 : i32, i32
  }
  func.func @transform_1(%arg0: i32) -> (i32, i32) {
    %c0_i32 = arith.constant 0 : i32
    %c0_i32_0 = arith.constant 0 : i32
    %c0_i32_1 = arith.constant 0 : i32
    return %c0_i32, %c0_i32_0 : i32, i32
  }
  func.func @transform_2(%arg0: i32) -> (i32, i32) {
    %c0_i32 = arith.constant 0 : i32
    %c0_i32_0 = arith.constant 0 : i32
    %c0_i32_1 = arith.constant 0 : i32
    return %c0_i32, %c0_i32_0 : i32, i32
  }
  func.func @transform_3(%arg0: i32) -> (i32, i32) {
    %c0_i32 = arith.constant 0 : i32
    %c0_i32_0 = arith.constant 0 : i32
    %c0_i32_1 = arith.constant 0 : i32
    return %c0_i32, %c0_i32_0 : i32, i32
  }
  func.func @transform_4(%arg0: i32) -> (i32, i32) {
    %c0_i32 = arith.constant 0 : i32
    %c0_i32_0 = arith.constant 0 : i32
    %c0_i32_1 = arith.constant 0 : i32
    return %c0_i32, %c0_i32_0 : i32, i32
  }
  func.func @transform_5(%arg0: i32) -> (i32, i32) {
    %c0_i32 = arith.constant 0 : i32
    %c0_i32_0 = arith.constant 0 : i32
    %c0_i32_1 = arith.constant 0 : i32
    return %c0_i32, %c0_i32_0 : i32, i32
  }
  func.func @transform_6(%arg0: i32) -> (i32, i32, i32) {
    %c0_i32 = arith.constant 0 : i32
    %c0_i32_0 = arith.constant 0 : i32
    %c0_i32_1 = arith.constant 0 : i32
    %c0_i32_2 = arith.constant 0 : i32
    return %c0_i32, %c0_i32_0, %c0_i32_1 : i32, i32, i32
  }
  func.func @transform_7(%arg0: i32) -> (i32, i32) {
    %c0_i32 = arith.constant 0 : i32
    %c0_i32_0 = arith.constant 0 : i32
    %c0_i32_1 = arith.constant 0 : i32
    return %c0_i32, %c0_i32_0 : i32, i32
  }
}

</mosaic_0001>

<llo_original>
// kernel: tpu_custom_call.1
$region0: #{tpu_custom_call.1}
  #allocation0 [shape = 'u32[]', space=smem, size = 0x4, offset = 0x4, fixed_abs, tag = 'smem constant byte address 0x4 - core index']
  #allocation1 [shape = 'u32[144,128]{1,0:T(1,128)}', space=vmem, size = 0x12000, scoped, tag = 'internal scratch']
  #allocation2 [shape = 'f32[64,32]{1,0:T(8,128)}', space=vmem, size = 0x8000, scoped, tag = 'scratch operand']
  #allocation3 [shape = 'f32[64,32]{1,0:T(8,128)}', space=vmem, size = 0x8000, scoped, tag = 'scratch operand']
  #allocation4 [shape = 'f32[64,32]{1,0:T(8,128)}', space=vmem, size = 0x8000, scoped, tag = 'scratch operand']
  %s0 = inlined_call_operand.vmem [shape: f32[64,16], index: 0, kind: input, shape index: {}]
  %s1 = inlined_call_operand.vmem [shape: f32[64,1], index: 1, kind: input, shape index: {}]
  %s2 = inlined_call_operand.vmem [shape: f32[64,4], index: 2, kind: input, shape index: {}]
  %s3 = inlined_call_operand.vmem [shape: f32[8,32], index: 3, kind: input, shape index: {}]
  %s4 = inlined_call_operand.vmem [shape: f32[120,32], index: 4, kind: input, shape index: {}]
  %s5 = inlined_call_operand.vmem [shape: f32[4,32], index: 5, kind: input, shape index: {}]
  %s6 = inlined_call_operand.hbm [shape: f32[8,8,32], index: 6, kind: output, shape index: {0}]
  %s7 = inlined_call_operand.vmem [shape: f32[64,32], index: 7, kind: output, shape index: {1}]
  %8 = xla_tuple %s6, %s7
  %s9 = sld [smem:[#allocation0]]
  $region42: #{tpu_custom_call.1} parent=0
    _
  %s11 = ssub.s32 1, %s9
  %s12 = scalar_select 0, %s11, %s9
  $region1: #{tpu_custom_call.1} parent=0
    #allocation5 [shape = 'u8[32768]{0}', space=vmem, size = 0x8000, scoped, tag = 'output window, operand 0, single buffered']
    #allocation6 [shape = 's32[1]{0}', space=sflag, size = 0x4, scoped, tag = 'scoped memory for tpu_custom_call.1']
    %13 = vsyncpa [#allocation6], 0
    // Predicated region
    $region2: #{tpu_custom_call.1} parent=1 // pred_check
      _
    $region3: #{tpu_custom_call.1} parent=1 // pred_check_branch
      %15 = sbr.rel (0) target = $region5
    $region4: #{tpu_custom_call.1} parent=1 // pred_region
      _
    $region5: #{tpu_custom_call.1} parent=1 // pred_fallthru
      _
    // Predicated region
    $region6: #{tpu_custom_call.1} parent=1 // pred_check
      _
    $region7: #{tpu_custom_call.1} parent=1 // pred_check_branch
      %17 = sbr.rel (0) target = $region9
    $region8: #{tpu_custom_call.1} parent=1 // pred_region
      _
    $region9: #{tpu_custom_call.1} parent=1 // pred_fallthru
      _
    // Predicated region
    $region10: #{tpu_custom_call.1} parent=1 // pred_check
      _
    $region11: #{tpu_custom_call.1} parent=1 // pred_check_branch
      %19 = sbr.rel (0) target = $region13
    $region12: #{tpu_custom_call.1} parent=1 // pred_region
      _
    $region13: #{tpu_custom_call.1} parent=1 // pred_fallthru
      _
    // Predicated region
    $region14: #{tpu_custom_call.1} parent=1 // pred_check
      _
    $region15: #{tpu_custom_call.1} parent=1 // pred_check_branch
      %21 = sbr.rel (0) target = $region17
    $region16: #{tpu_custom_call.1} parent=1 // pred_region
      _
    $region17: #{tpu_custom_call.1} parent=1 // pred_fallthru
      _
    // Predicated region
    $region18: #{tpu_custom_call.1} parent=1 // pred_check
      _
    $region19: #{tpu_custom_call.1} parent=1 // pred_check_branch
      %23 = sbr.rel (0) target = $region21
    $region20: #{tpu_custom_call.1} parent=1 // pred_region
      _
    $region21: #{tpu_custom_call.1} parent=1 // pred_fallthru
      _
    // Predicated region
    $region22: #{tpu_custom_call.1} parent=1 // pred_check
      _
    $region23: #{tpu_custom_call.1} parent=1 // pred_check_branch
      %25 = sbr.rel (0) target = $region25
    $region24: #{tpu_custom_call.1} parent=1 // pred_region
      _
    $region25: #{tpu_custom_call.1} parent=1 // pred_fallthru
      _
    %v26 = vld [vmem:[%s4] sm:$0xff]
    %v27 = vld [vmem:[%s4 + $0x8] sm:$0xff]
    %v28 = vld [vmem:[%s4 + $0x10] sm:$0xff]
    %v29 = vld [vmem:[%s4 + $0x18] sm:$0xff]
    %v30 = vld [vmem:[%s4 + $0x20] sm:$0xff]
    %v31 = vld [vmem:[%s4 + $0x28] sm:$0xff]
    %v32 = vld [vmem:[%s4 + $0x30] sm:$0xff]
    %v33 = vld [vmem:[%s4 + $0x38] sm:$0xff]
    %v34 = vld [vmem:[%s4 + $0x40] sm:$0xff]
    %v35 = vld [vmem:[%s4 + $0x48] sm:$0xff]
    %v36 = vld [vmem:[%s4 + $0x50] sm:$0xff]
    %v37 = vld [vmem:[%s4 + $0x58] sm:$0xff]
    %v38 = vld [vmem:[%s4 + $0x60] sm:$0xff]
    %v39 = vld [vmem:[%s4 + $0x68] sm:$0xff]
    %v40 = vld [vmem:[%s4 + $0x70] sm:$0xf]
    %v41 = vld [vmem:[%s5] sm:$0x1]
    %v42 = vld [vmem:[%s5 + $0x1] sm:$0x1]
    %v43 = vld [vmem:[%s5 + $0x2] sm:$0x1]
    %v44 = vld [vmem:[%s5 + $0x3] sm:$0x1]
    %v45 = vld [vmem:[%s0] sm:$0xff]
    %v46 = vld [vmem:[%s0 + $0x8] sm:$0xff]
    %v47 = vld [vmem:[%s0 + $0x10] sm:$0xff]
    %v48 = vld [vmem:[%s0 + $0x18] sm:$0xff]
    %v49 = vld [vmem:[%s0 + $0x20] sm:$0xff]
    %v50 = vld [vmem:[%s0 + $0x28] sm:$0xff]
    %v51 = vld [vmem:[%s0 + $0x30] sm:$0xff]
    %v52 = vld [vmem:[%s0 + $0x38] sm:$0xff]
    %v53 = vlaneseq
    %v54 = vshrl.u32 %v53, 7
    %v55 = vsub.s32 0, %v54
    %v56 = vrot.slane %v41, %v55
    %vm57 = vcmask 130048
    %v59 = vsel %vm57, %v45, 0
    %v62 = vsel %vm57, %v46, 0
    %v65 = vsel %vm57, %v47, 0
    %v68 = vsel %vm57, %v48, 0
    %v71 = vsel %vm57, %v49, 0
    %v74 = vsel %vm57, %v50, 0
    %v77 = vsel %vm57, %v51, 0
    %v80 = vsel %vm57, %v52, 0
    %82 = vmatprep.subr.mxu0 0.0
    %83 = vmatpush1.msra.mxu0 %v26
    %84 = vmatprep.subr.mxu0 0.0
    %85 = vmatpush1.msra.mxu0 %v27
    %86 = vmatprep.subr.mxu0 0.0
    %87 = vmatpush1.msra.mxu0 0.0
    %88 = vmatprep.subr.mxu0 0.0
    %89 = vmatpush1.msra.mxu0 0.0
    %90 = vmatprep.subr.mxu0 0.0
    %91 = vmatpush1.msra.mxu0 0.0
    %92 = vmatprep.subr.mxu0 0.0
    %93 = vmatpush1.msra.mxu0 0.0
    %94 = vmatprep.subr.mxu0 0.0
    %95 = vmatpush1.msra.mxu0 0.0
    %96 = vmatprep.subr.mxu0 0.0
    %97 = vmatpush1.msra.mxu0 0.0
    %98 = vmatprep.subr.mxu0 0.0
    %99 = vmatpush1.msra.mxu0 0.0
    %100 = vmatprep.subr.mxu0 0.0
    %101 = vmatpush1.msra.mxu0 0.0
    %102 = vmatprep.subr.mxu0 0.0
    %103 = vmatpush1.msra.mxu0 0.0
    %104 = vmatprep.subr.mxu0 0.0
    %105 = vmatpush1.msra.mxu0 0.0
    %106 = vmatprep.subr.mxu0 0.0
    %107 = vmatpush1.msra.mxu0 0.0
    %108 = vmatprep.subr.mxu0 0.0
    %109 = vmatpush1.msra.mxu0 0.0
    %110 = vmatprep.subr.mxu0 0.0
    %111 = vmatpush1.msra.mxu0 0.0
    %112 = vmatprep.subr.mxu0 0.0
    %113 = vmatpush1.msra.mxu0 0.0
    %114 = vmatprep.subr.mxu0 0.0
    %115 = vmatpush1.msra.mxu0 0.0
    %116 = vmatprep.subr.mxu0 0.0
    %117 = vmatpush1.msra.mxu0 0.0
    %118 = vmatprep.subr.mxu0 0.0
    %119 = vmatpush1.msra.mxu0 0.0
    %120 = vmatprep.subr.mxu0 0.0
    %121 = vmatpush1.msra.mxu0 0.0
    %122 = vmatprep.subr.mxu0 0.0
    %123 = vmatpush1.msra.mxu0 0.0
    %124 = vmatprep.subr.mxu0 0.0
    %125 = vmatpush1.msra.mxu0 0.0
    %126 = vmatprep.subr.mxu0 0.0
    %127 = vmatpush1.msra.mxu0 0.0
    %128 = vmatprep.subr.mxu0 0.0
    %129 = vmatpush1.msra.mxu0 0.0
    %130 = vmatprep.subr.mxu0 0.0
    %131 = vmatpush1.msra.mxu0 0.0
    %132 = vmatprep.subr.mxu0 0.0
    %133 = vmatpush1.msra.mxu0 0.0
    %134 = vmatprep.subr.mxu0 0.0
    %135 = vmatpush1.msra.mxu0 0.0
    %136 = vmatprep.subr.mxu0 0.0
    %137 = vmatpush1.msra.mxu0 0.0
    %138 = vmatprep.subr.mxu0 0.0
    %139 = vmatpush1.msra.mxu0 0.0
    %140 = vmatprep.subr.mxu0 0.0
    %141 = vmatpush1.msra.mxu0 0.0
    %142 = vmatprep.subr.mxu0 0.0
    %143 = vmatpush1.msra.mxu0 0.0
    %144 = vmatprep.subr.mxu0 0.0
    %145 = vmatpush1.msra.mxu0 0.0
    %146 = vmatprep.mubr.f32.mxu0 0.0
    %147 = vmatmul.mubr.f32.gmra.mrb[0].mxu0 %v59
    %v148 = vpop.f32.mrb[0].mxu0
    %v149 = vadd.f32 %v56, %v148
    %v150 = vpop.f32.mrb[0].mxu0
    %151 = vmatprep.mubr.f32.mxu0 0.0
    %152 = vmatmul.mubr.f32.gmra.mrb[0].mxu0 %v62
    %v153 = vpop.f32.mrb[0].mxu0
    %v154 = vadd.f32 %v56, %v153
    %v155 = vpop.f32.mrb[0].mxu0
    %156 = vmatprep.mubr.f32.mxu0 0.0
    %157 = vmatmul.mubr.f32.gmra.mrb[0].mxu0 %v65
    %v158 = vpop.f32.mrb[0].mxu0
    %v159 = vadd.f32 %v56, %v158
    %v160 = vpop.f32.mrb[0].mxu0
    %161 = vmatprep.mubr.f32.mxu0 0.0
    %162 = vmatmul.mubr.f32.gmra.mrb[0].mxu0 %v68
    %v163 = vpop.f32.mrb[0].mxu0
    %v164 = vadd.f32 %v56, %v163
    %v165 = vpop.f32.mrb[0].mxu0
    %166 = vmatprep.mubr.f32.mxu0 0.0
    %167 = vmatmul.mubr.f32.gmra.mrb[0].mxu0 %v71
    %v168 = vpop.f32.mrb[0].mxu0
    %v169 = vadd.f32 %v56, %v168
    %v170 = vpop.f32.mrb[0].mxu0
    %171 = vmatprep.mubr.f32.mxu0 0.0
    %172 = vmatmul.mubr.f32.gmra.mrb[0].mxu0 %v74
    %v173 = vpop.f32.mrb[0].mxu0
    %v174 = vadd.f32 %v56, %v173
    %v175 = vpop.f32.mrb[0].mxu0
    %176 = vmatprep.mubr.f32.mxu0 0.0
    %177 = vmatmul.mubr.f32.gmra.mrb[0].mxu0 %v77
    %v178 = vpop.f32.mrb[0].mxu0
    %v179 = vadd.f32 %v56, %v178
    %v180 = vpop.f32.mrb[0].mxu0
    %181 = vmatprep.mubr.f32.mxu0 0.0
    %182 = vmatmul.mubr.f32.gmra.mrb[0].mxu0 %v80
    %v183 = vpop.f32.mrb[0].mxu0
    %v184 = vadd.f32 %v56, %v183
    %v185 = vpop.f32.mrb[0].mxu0
    %186 = vdwg.mxu0
    %v187 = vtanh.pop %v149
    %v188 = vtanh.pop %v154
    %v189 = vtanh.pop %v159
    %v190 = vtanh.pop %v164
    %v191 = vtanh.pop %v169
    %v192 = vtanh.pop %v174
    %v193 = vtanh.pop %v179
    %v194 = vtanh.pop %v184
    %v195 = vlaneseq
    %v196 = vshrl.u32 %v195, 7
    %v197 = vsub.s32 0, %v196
    %v198 = vrot.slane %v42, %v197
    %vm199 = vcmask 261120
    %v201 = vsel %vm199, %v187, 0
    %v204 = vsel %vm199, %v188, 0
    %v207 = vsel %vm199, %v189, 0
    %v210 = vsel %vm199, %v190, 0
    %v213 = vsel %vm199, %v191, 0
    %v216 = vsel %vm199, %v192, 0
    %v219 = vsel %vm199, %v193, 0
    %v222 = vsel %vm199, %v194, 0
    %224 = vmatprep.subr.mxu0 0.0
    %225 = vmatpush1.msra.mxu0 %v28
    %226 = vmatprep.subr.mxu0 0.0
    %227 = vmatpush1.msra.mxu0 %v29
    %228 = vmatprep.subr.mxu0 0.0
    %229 = vmatpush1.msra.mxu0 %v30
    %230 = vmatprep.subr.mxu0 0.0
    %231 = vmatpush1.msra.mxu0 %v31
    %232 = vmatprep.subr.mxu0 0.0
    %233 = vmatpush1.msra.mxu0 0.0
    %234 = vmatprep.subr.mxu0 0.0
    %235 = vmatpush1.msra.mxu0 0.0
    %236 = vmatprep.subr.mxu0 0.0
    %237 = vmatpush1.msra.mxu0 0.0
    %238 = vmatprep.subr.mxu0 0.0
    %239 = vmatpush1.msra.mxu0 0.0
    %240 = vmatprep.subr.mxu0 0.0
    %241 = vmatpush1.msra.mxu0 0.0
    %242 = vmatprep.subr.mxu0 0.0
    %243 = vmatpush1.msra.mxu0 0.0
    %244 = vmatprep.subr.mxu0 0.0
    %245 = vmatpush1.msra.mxu0 0.0
    %246 = vmatprep.subr.mxu0 0.0
    %247 = vmatpush1.msra.mxu0 0.0
    %248 = vmatprep.subr.mxu0 0.0
    %249 = vmatpush1.msra.mxu0 0.0
    %250 = vmatprep.subr.mxu0 0.0
    %251 = vmatpush1.msra.mxu0 0.0
    %252 = vmatprep.subr.mxu0 0.0
    %253 = vmatpush1.msra.mxu0 0.0
    %254 = vmatprep.subr.mxu0 0.0
    %255 = vmatpush1.msra.mxu0 0.0
    %256 = vmatprep.subr.mxu0 0.0
    %257 = vmatpush1.msra.mxu0 0.0
    %258 = vmatprep.subr.mxu0 0.0
    %259 = vmatpush1.msra.mxu0 0.0
    %260 = vmatprep.subr.mxu0 0.0
    %261 = vmatpush1.msra.mxu0 0.0
    %262 = vmatprep.subr.mxu0 0.0
    %263 = vmatpush1.msra.mxu0 0.0
    %264 = vmatprep.subr.mxu0 0.0
    %265 = vmatpush1.msra.mxu0 0.0
    %266 = vmatprep.subr.mxu0 0.0
    %267 = vmatpush1.msra.mxu0 0.0
    %268 = vmatprep.subr.mxu0 0.0
    %269 = vmatpush1.msra.mxu0 0.0
    %270 = vmatprep.subr.mxu0 0.0
    %271 = vmatpush1.msra.mxu0 0.0
    %272 = vmatprep.subr.mxu0 0.0
    %273 = vmatpush1.msra.mxu0 0.0
    %274 = vmatprep.subr.mxu0 0.0
    %275 = vmatpush1.msra.mxu0 0.0
    %276 = vmatprep.subr.mxu0 0.0
    %277 = vmatpush1.msra.mxu0 0.0
    %278 = vmatprep.subr.mxu0 0.0
    %279 = vmatpush1.msra.mxu0 0.0
    %280 = vmatprep.subr.mxu0 0.0
    %281 = vmatpush1.msra.mxu0 0.0
    %282 = vmatprep.subr.mxu0 0.0
    %283 = vmatpush1.msra.mxu0 0.0
    %284 = vmatprep.subr.mxu0 0.0
    %285 = vmatpush1.msra.mxu0 0.0
    %286 = vmatprep.subr.mxu0 0.0
    %287 = vmatpush1.msra.mxu0 0.0
    %288 = vmatprep.mubr.f32.mxu0 0.0
    %289 = vmatmul.mubr.f32.gmra.mrb[0].mxu0 %v201
    %v290 = vpop.f32.mrb[0].mxu0
    %v291 = vadd.f32 %v198, %v290
    %v292 = vpop.f32.mrb[0].mxu0
    %293 = vmatprep.mubr.f32.mxu0 0.0
    %294 = vmatmul.mubr.f32.gmra.mrb[0].mxu0 %v204
    %v295 = vpop.f32.mrb[0].mxu0
    %v296 = vadd.f32 %v198, %v295
    %v297 = vpop.f32.mrb[0].mxu0
    %298 = vmatprep.mubr.f32.mxu0 0.0
    %299 = vmatmul.mubr.f32.gmra.mrb[0].mxu0 %v207
    %v300 = vpop.f32.mrb[0].mxu0
    %v301 = vadd.f32 %v198, %v300
    %v302 = vpop.f32.mrb[0].mxu0
    %303 = vmatprep.mubr.f32.mxu0 0.0
    %304 = vmatmul.mubr.f32.gmra.mrb[0].mxu0 %v210
    %v305 = vpop.f32.mrb[0].mxu0
    %v306 = vadd.f32 %v198, %v305
    %v307 = vpop.f32.mrb[0].mxu0
    %308 = vmatprep.mubr.f32.mxu0 0.0
    %309 = vmatmul.mubr.f32.gmra.mrb[0].mxu0 %v213
    %v310 = vpop.f32.mrb[0].mxu0
    %v311 = vadd.f32 %v198, %v310
    %v312 = vpop.f32.mrb[0].mxu0
    %313 = vmatprep.mubr.f32.mxu0 0.0
    %314 = vmatmul.mubr.f32.gmra.mrb[0].mxu0 %v216
    %v315 = vpop.f32.mrb[0].mxu0
    %v316 = vadd.f32 %v198, %v315
    %v317 = vpop.f32.mrb[0].mxu0
    %318 = vmatprep.mubr.f32.mxu0 0.0
    %319 = vmatmul.mubr.f32.gmra.mrb[0].mxu0 %v219
    %v320 = vpop.f32.mrb[0].mxu0
    %v321 = vadd.f32 %v198, %v320
    %v322 = vpop.f32.mrb[0].mxu0
    %323 = vmatprep.mubr.f32.mxu0 0.0
    %324 = vmatmul.mubr.f32.gmra.mrb[0].mxu0 %v222
    %v325 = vpop.f32.mrb[0].mxu0
    %v326 = vadd.f32 %v198, %v325
    %v327 = vpop.f32.mrb[0].mxu0
    %328 = vdwg.mxu0
    %v329 = vtanh.pop %v291
    %v330 = vtanh.pop %v296
    %v331 = vtanh.pop %v301
    %v332 = vtanh.pop %v306
    %v333 = vtanh.pop %v311
    %v334 = vtanh.pop %v316
    %v335 = vtanh.pop %v321
    %v336 = vtanh.pop %v326
    %337 = vst.msk [vmem:[%s7] sm:$0xff] %vm199, %v329
    %338 = vst.msk [vmem:[%s7 + $0x8] sm:$0xff] %vm199, %v330
    %339 = vst.msk [vmem:[%s7 + $0x10] sm:$0xff] %vm199, %v331
    %340 = vst.msk [vmem:[%s7 + $0x18] sm:$0xff] %vm199, %v332
    %341 = vst.msk [vmem:[%s7 + $0x20] sm:$0xff] %vm199, %v333
    %342 = vst.msk [vmem:[%s7 + $0x28] sm:$0xff] %vm199, %v334
    %343 = vst.msk [vmem:[%s7 + $0x30] sm:$0xff] %vm199, %v335
    %344 = vst.msk [vmem:[%s7 + $0x38] sm:$0xff] %vm199, %v336
    %v345 = vld [vmem:[%s1] sm:$0xff]
    %v346 = vld [vmem:[%s1 + $0x8] sm:$0xff]
    %v347 = vld [vmem:[%s1 + $0x10] sm:$0xff]
    %v348 = vld [vmem:[%s1 + $0x18] sm:$0xff]
    %v349 = vld [vmem:[%s1 + $0x20] sm:$0xff]
    %v350 = vld [vmem:[%s1 + $0x28] sm:$0xff]
    %v351 = vld [vmem:[%s1 + $0x30] sm:$0xff]
    %v352 = vld [vmem:[%s1 + $0x38] sm:$0xff]
    %354 = vset.pattern.permute.xlu0 0
    %355 = vperm.xlu0 %354, %v345
    %v356 = vpop.permute.xlu0 %355
    %359 = vset.pattern.permute.xlu0 0
    %360 = vperm.xlu0 %359, %v346
    %v361 = vpop.permute.xlu0 %360
    %364 = vset.pattern.permute.xlu0 0
    %365 = vperm.xlu0 %364, %v347
    %v366 = vpop.permute.xlu0 %365
    %369 = vset.pattern.permute.xlu0 0
    %370 = vperm.xlu0 %369, %v348
    %v371 = vpop.permute.xlu0 %370
    %374 = vset.pattern.permute.xlu0 0
    %375 = vperm.xlu0 %374, %v349
    %v376 = vpop.permute.xlu0 %375
    %379 = vset.pattern.permute.xlu0 0
    %380 = vperm.xlu0 %379, %v350
    %v381 = vpop.permute.xlu0 %380
    %384 = vset.pattern.permute.xlu0 0
    %385 = vperm.xlu0 %384, %v351
    %v386 = vpop.permute.xlu0 %385
    %389 = vset.pattern.permute.xlu0 0
    %390 = vperm.xlu0 %389, %v352
    %v391 = vpop.permute.xlu0 %390
    %393 = vst.msk [vmem:[#allocation4] sm:$0xff] %vm199, %v356
    %394 = vst.msk [vmem:[#allocation4 + $0x8] sm:$0xff] %vm199, %v361
    %395 = vst.msk [vmem:[#allocation4 + $0x10] sm:$0xff] %vm199, %v366
    %396 = vst.msk [vmem:[#allocation4 + $0x18] sm:$0xff] %vm199, %v371
    %397 = vst.msk [vmem:[#allocation4 + $0x20] sm:$0xff] %vm199, %v376
    %398 = vst.msk [vmem:[#allocation4 + $0x28] sm:$0xff] %vm199, %v381
    %399 = vst.msk [vmem:[#allocation4 + $0x30] sm:$0xff] %vm199, %v386
    %400 = vst.msk [vmem:[#allocation4 + $0x38] sm:$0xff] %vm199, %v391
    %v401 = vsub.f32 1.0, %v356
    %v402 = vsub.f32 1.0, %v361
    %v403 = vsub.f32 1.0, %v366
    %v404 = vsub.f32 1.0, %v371
    %v405 = vsub.f32 1.0, %v376
    %v406 = vsub.f32 1.0, %v381
    %v407 = vsub.f32 1.0, %v386
    %v408 = vsub.f32 1.0, %v391
    %v409 = vmul.f32 %v401, %v329
    %v410 = vmul.f32 %v402, %v330
    %v411 = vmul.f32 %v403, %v331
    %v412 = vmul.f32 %v404, %v332
    %v413 = vmul.f32 %v405, %v333
    %v414 = vmul.f32 %v406, %v334
    %v415 = vmul.f32 %v407, %v335
    %v416 = vmul.f32 %v408, %v336
    %417 = vst.msk [vmem:[#allocation3] sm:$0xff] %vm199, %v409
    %418 = vst.msk [vmem:[#allocation3 + $0x8] sm:$0xff] %vm199, %v410
    %419 = vst.msk [vmem:[#allocation3 + $0x10] sm:$0xff] %vm199, %v411
    %420 = vst.msk [vmem:[#allocation3 + $0x18] sm:$0xff] %vm199, %v412
    %421 = vst.msk [vmem:[#allocation3 + $0x20] sm:$0xff] %vm199, %v413
    %422 = vst.msk [vmem:[#allocation3 + $0x28] sm:$0xff] %vm199, %v414
    %423 = vst.msk [vmem:[#allocation3 + $0x30] sm:$0xff] %vm199, %v415
    %424 = vst.msk [vmem:[#allocation3 + $0x38] sm:$0xff] %vm199, %v416
    %v425 = vld [vmem:[%s2] sm:$0xff]
    %v426 = vld [vmem:[%s2 + $0x8] sm:$0xff]
    %v427 = vld [vmem:[%s2 + $0x10] sm:$0xff]
    %v428 = vld [vmem:[%s2 + $0x18] sm:$0xff]
    %v429 = vld [vmem:[%s2 + $0x20] sm:$0xff]
    %v430 = vld [vmem:[%s2 + $0x28] sm:$0xff]
    %v431 = vld [vmem:[%s2 + $0x30] sm:$0xff]
    %v432 = vld [vmem:[%s2 + $0x38] sm:$0xff]
    %v433 = vlaneseq
    %v434 = vshrl.u32 %v433, 7
    %v435 = vsub.s32 0, %v434
    %v436 = vrot.slane %v43, %v435
    %vm437 = vcmask 31744
    %v439 = vsel %vm437, %v425, 0
    %v442 = vsel %vm437, %v426, 0
    %v445 = vsel %vm437, %v427, 0
    %v448 = vsel %vm437, %v428, 0
    %v451 = vsel %vm437, %v429, 0
    %v454 = vsel %vm437, %v430, 0
    %v457 = vsel %vm437, %v431, 0
    %v460 = vsel %vm437, %v432, 0
    %vm462 = vcmask 1043456
    %v464 = vsel %vm462, %v40, 0
    %466 = vmatprep.subr.mxu0 0.0
    %467 = vmatpush1.msra.mxu0 %v464
    %468 = vmatprep.subr.mxu0 0.0
    %469 = vmatpush1.msra.mxu0 0.0
    %470 = vmatprep.subr.mxu0 0.0
    %471 = vmatpush1.msra.mxu0 0.0
    %472 = vmatprep.subr.mxu0 0.0
    %473 = vmatpush1.msra.mxu0 0.0
    %474 = vmatprep.subr.mxu0 0.0
    %475 = vmatpush1.msra.mxu0 0.0
    %476 = vmatprep.subr.mxu0 0.0
    %477 = vmatpush1.msra.mxu0 0.0
    %478 = vmatprep.subr.mxu0 0.0
    %479 = vmatpush1.msra.mxu0 0.0
    %480 = vmatprep.subr.mxu0 0.0
    %481 = vmatpush1.msra.mxu0 0.0
    %482 = vmatprep.subr.mxu0 0.0
    %483 = vmatpush1.msra.mxu0 0.0
    %484 = vmatprep.subr.mxu0 0.0
    %485 = vmatpush1.msra.mxu0 0.0
    %486 = vmatprep.subr.mxu0 0.0
    %487 = vmatpush1.msra.mxu0 0.0
    %488 = vmatprep.subr.mxu0 0.0
    %489 = vmatpush1.msra.mxu0 0.0
    %490 = vmatprep.subr.mxu0 0.0
    %491 = vmatpush1.msra.mxu0 0.0
    %492 = vmatprep.subr.mxu0 0.0
    %493 = vmatpush1.msra.mxu0 0.0
    %494 = vmatprep.subr.mxu0 0.0
    %495 = vmatpush1.msra.mxu0 0.0
    %496 = vmatprep.subr.mxu0 0.0
    %497 = vmatpush1.msra.mxu0 0.0
    %498 = vmatprep.subr.mxu0 0.0
    %499 = vmatpush1.msra.mxu0 0.0
    %500 = vmatprep.subr.mxu0 0.0
    %501 = vmatpush1.msra.mxu0 0.0
    %502 = vmatprep.subr.mxu0 0.0
    %503 = vmatpush1.msra.mxu0 0.0
    %504 = vmatprep.subr.mxu0 0.0
    %505 = vmatpush1.msra.mxu0 0.0
    %506 = vmatprep.subr.mxu0 0.0
    %507 = vmatpush1.msra.mxu0 0.0
    %508 = vmatprep.subr.mxu0 0.0
    %509 = vmatpush1.msra.mxu0 0.0
    %510 = vmatprep.subr.mxu0 0.0
    %511 = vmatpush1.msra.mxu0 0.0
    %512 = vmatprep.subr.mxu0 0.0
    %513 = vmatpush1.msra.mxu0 0.0
    %514 = vmatprep.subr.mxu0 0.0
    %515 = vmatpush1.msra.mxu0 0.0
    %516 = vmatprep.subr.mxu0 0.0
    %517 = vmatpush1.msra.mxu0 0.0
    %518 = vmatprep.subr.mxu0 0.0
    %519 = vmatpush1.msra.mxu0 0.0
    %520 = vmatprep.subr.mxu0 0.0
    %521 = vmatpush1.msra.mxu0 0.0
    %522 = vmatprep.subr.mxu0 0.0
    %523 = vmatpush1.msra.mxu0 0.0
    %524 = vmatprep.subr.mxu0 0.0
    %525 = vmatpush1.msra.mxu0 0.0
    %526 = vmatprep.subr.mxu0 0.0
    %527 = vmatpush1.msra.mxu0 0.0
    %528 = vmatprep.subr.mxu0 0.0
    %529 = vmatpush1.msra.mxu0 0.0
    %530 = vmatprep.mubr.f32.mxu0 0.0
    %531 = vmatmul.mubr.f32.gmra.mrb[0].mxu0 %v439
    %v532 = vpop.f32.mrb[0].mxu0
    %v533 = vadd.f32 %v436, %v532
    %v534 = vpop.f32.mrb[0].mxu0
    %535 = vmatprep.mubr.f32.mxu0 0.0
    %536 = vmatmul.mubr.f32.gmra.mrb[0].mxu0 %v442
    %v537 = vpop.f32.mrb[0].mxu0
    %v538 = vadd.f32 %v436, %v537
    %v539 = vpop.f32.mrb[0].mxu0
    %540 = vmatprep.mubr.f32.mxu0 0.0
    %541 = vmatmul.mubr.f32.gmra.mrb[0].mxu0 %v445
    %v542 = vpop.f32.mrb[0].mxu0
    %v543 = vadd.f32 %v436, %v542
    %v544 = vpop.f32.mrb[0].mxu0
    %545 = vmatprep.mubr.f32.mxu0 0.0
    %546 = vmatmul.mubr.f32.gmra.mrb[0].mxu0 %v448
    %v547 = vpop.f32.mrb[0].mxu0
    %v548 = vadd.f32 %v436, %v547
    %v549 = vpop.f32.mrb[0].mxu0
    %550 = vmatprep.mubr.f32.mxu0 0.0
    %551 = vmatmul.mubr.f32.gmra.mrb[0].mxu0 %v451
    %v552 = vpop.f32.mrb[0].mxu0
    %v553 = vadd.f32 %v436, %v552
    %v554 = vpop.f32.mrb[0].mxu0
    %555 = vmatprep.mubr.f32.mxu0 0.0
    %556 = vmatmul.mubr.f32.gmra.mrb[0].mxu0 %v454
    %v557 = vpop.f32.mrb[0].mxu0
    %v558 = vadd.f32 %v436, %v557
    %v559 = vpop.f32.mrb[0].mxu0
    %560 = vmatprep.mubr.f32.mxu0 0.0
    %561 = vmatmul.mubr.f32.gmra.mrb[0].mxu0 %v457
    %v562 = vpop.f32.mrb[0].mxu0
    %v563 = vadd.f32 %v436, %v562
    %v564 = vpop.f32.mrb[0].mxu0
    %565 = vmatprep.mubr.f32.mxu0 0.0
    %566 = vmatmul.mubr.f32.gmra.mrb[0].mxu0 %v460
    %v567 = vpop.f32.mrb[0].mxu0
    %v568 = vadd.f32 %v436, %v567
    %v569 = vpop.f32.mrb[0].mxu0
    %570 = vdwg.mxu0
    %571 = vst.msk [vmem:[#allocation2] sm:$0xff] %vm199, %v533
    %572 = vst.msk [vmem:[#allocation2 + $0x8] sm:$0xff] %vm199, %v538
    %573 = vst.msk [vmem:[#allocation2 + $0x10] sm:$0xff] %vm199, %v543
    %574 = vst.msk [vmem:[#allocation2 + $0x18] sm:$0xff] %vm199, %v548
    %575 = vst.msk [vmem:[#allocation2 + $0x20] sm:$0xff] %vm199, %v553
    %576 = vst.msk [vmem:[#allocation2 + $0x28] sm:$0xff] %vm199, %v558
    %577 = vst.msk [vmem:[#allocation2 + $0x30] sm:$0xff] %vm199, %v563
    %578 = vst.msk [vmem:[#allocation2 + $0x38] sm:$0xff] %vm199, %v568
    %v579 = vlaneseq
    %v580 = vshrl.u32 %v579, 7
    %v581 = vsub.s32 0, %v580
    %v582 = vrot.slane %v44, %v581
    %v583 = vld [vmem:[%s3] sm:$0xff]
    %v584 = vld [vmem:[#allocation2] sm:$0xff]
    %v586 = vsel %vm199, %v583, 0
    %588 = vmatprep.subr.mxu0 0.0
    %589 = vmatpush1.msra.mxu0 %v32
    %590 = vmatprep.subr.mxu0 0.0
    %591 = vmatpush1.msra.mxu0 %v33
    %592 = vmatprep.subr.mxu0 0.0
    %593 = vmatpush1.msra.mxu0 %v34
    %594 = vmatprep.subr.mxu0 0.0
    %595 = vmatpush1.msra.mxu0 %v35
    %596 = vmatprep.subr.mxu0 0.0
    %597 = vmatpush1.msra.mxu0 0.0
    %598 = vmatprep.subr.mxu0 0.0
    %599 = vmatpush1.msra.mxu0 0.0
    %600 = vmatprep.subr.mxu0 0.0
    %601 = vmatpush1.msra.mxu0 0.0
    %602 = vmatprep.subr.mxu0 0.0
    %603 = vmatpush1.msra.mxu0 0.0
    %604 = vmatprep.subr.mxu0 0.0
    %605 = vmatpush1.msra.mxu0 0.0
    %606 = vmatprep.subr.mxu0 0.0
    %607 = vmatpush1.msra.mxu0 0.0
    %608 = vmatprep.subr.mxu0 0.0
    %609 = vmatpush1.msra.mxu0 0.0
    %610 = vmatprep.subr.mxu0 0.0
    %611 = vmatpush1.msra.mxu0 0.0
    %612 = vmatprep.subr.mxu0 0.0
    %613 = vmatpush1.msra.mxu0 0.0
    %614 = vmatprep.subr.mxu0 0.0
    %615 = vmatpush1.msra.mxu0 0.0
    %616 = vmatprep.subr.mxu0 0.0
    %617 = vmatpush1.msra.mxu0 0.0
    %618 = vmatprep.subr.mxu0 0.0
    %619 = vmatpush1.msra.mxu0 0.0
    %620 = vmatprep.subr.mxu0 0.0
    %621 = vmatpush1.msra.mxu0 0.0
    %622 = vmatprep.subr.mxu0 0.0
    %623 = vmatpush1.msra.mxu0 0.0
    %624 = vmatprep.subr.mxu0 0.0
    %625 = vmatpush1.msra.mxu0 0.0
    %626 = vmatprep.subr.mxu0 0.0
    %627 = vmatpush1.msra.mxu0 0.0
    %628 = vmatprep.subr.mxu0 0.0
    %629 = vmatpush1.msra.mxu0 0.0
    %630 = vmatprep.subr.mxu0 0.0
    %631 = vmatpush1.msra.mxu0 0.0
    %632 = vmatprep.subr.mxu0 0.0
    %633 = vmatpush1.msra.mxu0 0.0
    %634 = vmatprep.subr.mxu0 0.0
    %635 = vmatpush1.msra.mxu0 0.0
    %636 = vmatprep.subr.mxu0 0.0
    %637 = vmatpush1.msra.mxu0 0.0
    %638 = vmatprep.subr.mxu0 0.0
    %639 = vmatpush1.msra.mxu0 0.0
    %640 = vmatprep.subr.mxu0 0.0
    %641 = vmatpush1.msra.mxu0 0.0
    %642 = vmatprep.subr.mxu0 0.0
    %643 = vmatpush1.msra.mxu0 0.0
    %644 = vmatprep.subr.mxu0 0.0
    %645 = vmatpush1.msra.mxu0 0.0
    %646 = vmatprep.subr.mxu0 0.0
    %647 = vmatpush1.msra.mxu0 0.0
    %648 = vmatprep.subr.mxu0 0.0
    %649 = vmatpush1.msra.mxu0 0.0
    %650 = vmatprep.subr.mxu0 0.0
    %651 = vmatpush1.msra.mxu0 0.0
    %652 = vmatprep.mubr.f32.mxu0 0.0
    %653 = vmatmul.mubr.f32.gmra.mrb[0].mxu0 %v586
    %v654 = vpop.f32.mrb[0].mxu0
    %v655 = vadd.f32 %v584, %v654
    %v656 = vpop.f32.mrb[0].mxu0
    %657 = vdwg.mxu0
    %v658 = vtanh.pop %v655
    %v660 = vsel %vm199, %v658, 0
    %662 = vmatprep.subr.mxu0 0.0
    %663 = vmatpush1.msra.mxu0 %v36
    %664 = vmatprep.subr.mxu0 0.0
    %665 = vmatpush1.msra.mxu0 %v37
    %666 = vmatprep.subr.mxu0 0.0
    %667 = vmatpush1.msra.mxu0 %v38
    %668 = vmatprep.subr.mxu0 0.0
    %669 = vmatpush1.msra.mxu0 %v39
    %670 = vmatprep.subr.mxu0 0.0
    %671 = vmatpush1.msra.mxu0 0.0
    %672 = vmatprep.subr.mxu0 0.0
    %673 = vmatpush1.msra.mxu0 0.0
    %674 = vmatprep.subr.mxu0 0.0
    %675 = vmatpush1.msra.mxu0 0.0
    %676 = vmatprep.subr.mxu0 0.0
    %677 = vmatpush1.msra.mxu0 0.0
    %678 = vmatprep.subr.mxu0 0.0
    %679 = vmatpush1.msra.mxu0 0.0
    %680 = vmatprep.subr.mxu0 0.0
    %681 = vmatpush1.msra.mxu0 0.0
    %682 = vmatprep.subr.mxu0 0.0
    %683 = vmatpush1.msra.mxu0 0.0
    %684 = vmatprep.subr.mxu0 0.0
    %685 = vmatpush1.msra.mxu0 0.0
    %686 = vmatprep.subr.mxu0 0.0
    %687 = vmatpush1.msra.mxu0 0.0
    %688 = vmatprep.subr.mxu0 0.0
    %689 = vmatpush1.msra.mxu0 0.0
    %690 = vmatprep.subr.mxu0 0.0
    %691 = vmatpush1.msra.mxu0 0.0
    %692 = vmatprep.subr.mxu0 0.0
    %693 = vmatpush1.msra.mxu0 0.0
    %694 = vmatprep.subr.mxu0 0.0
    %695 = vmatpush1.msra.mxu0 0.0
    %696 = vmatprep.subr.mxu0 0.0
    %697 = vmatpush1.msra.mxu0 0.0
    %698 = vmatprep.subr.mxu0 0.0
    %699 = vmatpush1.msra.mxu0 0.0
    %700 = vmatprep.subr.mxu0 0.0
    %701 = vmatpush1.msra.mxu0 0.0
    %702 = vmatprep.subr.mxu0 0.0
    %703 = vmatpush1.msra.mxu0 0.0
    %704 = vmatprep.subr.mxu0 0.0
    %705 = vmatpush1.msra.mxu0 0.0
    %706 = vmatprep.subr.mxu0 0.0
    %707 = vmatpush1.msra.mxu0 0.0
    %708 = vmatprep.subr.mxu0 0.0
    %709 = vmatpush1.msra.mxu0 0.0
    %710 = vmatprep.subr.mxu0 0.0
    %711 = vmatpush1.msra.mxu0 0.0
    %712 = vmatprep.subr.mxu0 0.0
    %713 = vmatpush1.msra.mxu0 0.0
    %714 = vmatprep.subr.mxu0 0.0
    %715 = vmatpush1.msra.mxu0 0.0
    %716 = vmatprep.subr.mxu0 0.0
    %717 = vmatpush1.msra.mxu0 0.0
    %718 = vmatprep.subr.mxu0 0.0
    %719 = vmatpush1.msra.mxu0 0.0
    %720 = vmatprep.subr.mxu0 0.0
    %721 = vmatpush1.msra.mxu0 0.0
    %722 = vmatprep.subr.mxu0 0.0
    %723 = vmatpush1.msra.mxu0 0.0
    %724 = vmatprep.subr.mxu0 0.0
    %725 = vmatpush1.msra.mxu0 0.0
    %726 = vmatprep.mubr.f32.mxu0 0.0
    %727 = vmatmul.mubr.f32.gmra.mrb[0].mxu0 %v660
    %v728 = vpop.f32.mrb[0].mxu0
    %v729 = vadd.f32 %v582, %v728
    %v730 = vpop.f32.mrb[0].mxu0
    %731 = vdwg.mxu0
    %v732 = vtanh.pop %v729
    %v733 = vld [vmem:[#allocation3] sm:$0xff]
    %v734 = vld [vmem:[#allocation4] sm:$0xff]
    %v735 = vmul.f32 %v734, %v732
    %v736 = vadd.f32 %v733, %v735
    %737 = vst.msk [vmem:[#allocation5] sm:$0xff] %vm199, %v736
    %s738 = scalar_lea.vmem [#allocation2], 8
    %v739 = vld [vmem:[%s738] sm:$0xff]
    %v741 = vsel %vm199, %v736, 0
    %743 = vmatprep.subr.mxu0 0.0
    %744 = vmatpush1.msra.mxu0 %v32
    %745 = vmatprep.subr.mxu0 0.0
    %746 = vmatpush1.msra.mxu0 %v33
    %747 = vmatprep.subr.mxu0 0.0
    %748 = vmatpush1.msra.mxu0 %v34
    %749 = vmatprep.subr.mxu0 0.0
    %750 = vmatpush1.msra.mxu0 %v35
    %751 = vmatprep.subr.mxu0 0.0
    %752 = vmatpush1.msra.mxu0 0.0
    %753 = vmatprep.subr.mxu0 0.0
    %754 = vmatpush1.msra.mxu0 0.0
    %755 = vmatprep.subr.mxu0 0.0
    %756 = vmatpush1.msra.mxu0 0.0
    %757 = vmatprep.subr.mxu0 0.0
    %758 = vmatpush1.msra.mxu0 0.0
    %759 = vmatprep.subr.mxu0 0.0
    %760 = vmatpush1.msra.mxu0 0.0
    %761 = vmatprep.subr.mxu0 0.0
    %762 = vmatpush1.msra.mxu0 0.0
    %763 = vmatprep.subr.mxu0 0.0
    %764 = vmatpush1.msra.mxu0 0.0
    %765 = vmatprep.subr.mxu0 0.0
    %766 = vmatpush1.msra.mxu0 0.0
    %767 = vmatprep.subr.mxu0 0.0
    %768 = vmatpush1.msra.mxu0 0.0
    %769 = vmatprep.subr.mxu0 0.0
    %770 = vmatpush1.msra.mxu0 0.0
    %771 = vmatprep.subr.mxu0 0.0
    %772 = vmatpush1.msra.mxu0 0.0
    %773 = vmatprep.subr.mxu0 0.0
    %774 = vmatpush1.msra.mxu0 0.0
    %775 = vmatprep.subr.mxu0 0.0
    %776 = vmatpush1.msra.mxu0 0.0
    %777 = vmatprep.subr.mxu0 0.0
    %778 = vmatpush1.msra.mxu0 0.0
    %779 = vmatprep.subr.mxu0 0.0
    %780 = vmatpush1.msra.mxu0 0.0
    %781 = vmatprep.subr.mxu0 0.0
    %782 = vmatpush1.msra.mxu0 0.0
    %783 = vmatprep.subr.mxu0 0.0
    %784 = vmatpush1.msra.mxu0 0.0
    %785 = vmatprep.subr.mxu0 0.0
    %786 = vmatpush1.msra.mxu0 0.0
    %787 = vmatprep.subr.mxu0 0.0
    %788 = vmatpush1.msra.mxu0 0.0
    %789 = vmatprep.subr.mxu0 0.0
    %790 = vmatpush1.msra.mxu0 0.0
    %791 = vmatprep.subr.mxu0 0.0
    %792 = vmatpush1.msra.mxu0 0.0
    %793 = vmatprep.subr.mxu0 0.0
    %794 = vmatpush1.msra.mxu0 0.0
    %795 = vmatprep.subr.mxu0 0.0
    %796 = vmatpush1.msra.mxu0 0.0
    %797 = vmatprep.subr.mxu0 0.0
    %798 = vmatpush1.msra.mxu0 0.0
    %799 = vmatprep.subr.mxu0 0.0
    %800 = vmatpush1.msra.mxu0 0.0
    %801 = vmatprep.subr.mxu0 0.0
    %802 = vmatpush1.msra.mxu0 0.0
    %803 = vmatprep.subr.mxu0 0.0
    %804 = vmatpush1.msra.mxu0 0.0
    %805 = vmatprep.subr.mxu0 0.0
    %806 = vmatpush1.msra.mxu0 0.0
    %807 = vmatprep.mubr.f32.mxu0 0.0
    %808 = vmatmul.mubr.f32.gmra.mrb[0].mxu0 %v741
    %v809 = vpop.f32.mrb[0].mxu0
    %v810 = vadd.f32 %v739, %v809
    %v811 = vpop.f32.mrb[0].mxu0
    %812 = vdwg.mxu0
    %v813 = vtanh.pop %v810
    %v815 = vsel %vm199, %v813, 0
    %817 = vmatprep.subr.mxu0 0.0
    %818 = vmatpush1.msra.mxu0 %v36
    %819 = vmatprep.subr.mxu0 0.0
    %820 = vmatpush1.msra.mxu0 %v37
    %821 = vmatprep.subr.mxu0 0.0
    %822 = vmatpush1.msra.mxu0 %v38
    %823 = vmatprep.subr.mxu0 0.0
    %824 = vmatpush1.msra.mxu0 %v39
    %825 = vmatprep.subr.mxu0 0.0
    %826 = vmatpush1.msra.mxu0 0.0
    %827 = vmatprep.subr.mxu0 0.0
    %828 = vmatpush1.msra.mxu0 0.0
    %829 = vmatprep.subr.mxu0 0.0
    %830 = vmatpush1.msra.mxu0 0.0
    %831 = vmatprep.subr.mxu0 0.0
    %832 = vmatpush1.msra.mxu0 0.0
    %833 = vmatprep.subr.mxu0 0.0
    %834 = vmatpush1.msra.mxu0 0.0
    %835 = vmatprep.subr.mxu0 0.0
    %836 = vmatpush1.msra.mxu0 0.0
    %837 = vmatprep.subr.mxu0 0.0
    %838 = vmatpush1.msra.mxu0 0.0
    %839 = vmatprep.subr.mxu0 0.0
    %840 = vmatpush1.msra.mxu0 0.0
    %841 = vmatprep.subr.mxu0 0.0
    %842 = vmatpush1.msra.mxu0 0.0
    %843 = vmatprep.subr.mxu0 0.0
    %844 = vmatpush1.msra.mxu0 0.0
    %845 = vmatprep.subr.mxu0 0.0
    %846 = vmatpush1.msra.mxu0 0.0
    %847 = vmatprep.subr.mxu0 0.0
    %848 = vmatpush1.msra.mxu0 0.0
    %849 = vmatprep.subr.mxu0 0.0
    %850 = vmatpush1.msra.mxu0 0.0
    %851 = vmatprep.subr.mxu0 0.0
    %852 = vmatpush1.msra.mxu0 0.0
    %853 = vmatprep.subr.mxu0 0.0
    %854 = vmatpush1.msra.mxu0 0.0
    %855 = vmatprep.subr.mxu0 0.0
    %856 = vmatpush1.msra.mxu0 0.0
    %857 = vmatprep.subr.mxu0 0.0
    %858 = vmatpush1.msra.mxu0 0.0
    %859 = vmatprep.subr.mxu0 0.0
    %860 = vmatpush1.msra.mxu0 0.0
    %861 = vmatprep.subr.mxu0 0.0
    %862 = vmatpush1.msra.mxu0 0.0
    %863 = vmatprep.subr.mxu0 0.0
    %864 = vmatpush1.msra.mxu0 0.0
    %865 = vmatprep.subr.mxu0 0.0
    %866 = vmatpush1.msra.mxu0 0.0
    %867 = vmatprep.subr.mxu0 0.0
    %868 = vmatpush1.msra.mxu0 0.0
    %869 = vmatprep.subr.mxu0 0.0
    %870 = vmatpush1.msra.mxu0 0.0
    %871 = vmatprep.subr.mxu0 0.0
    %872 = vmatpush1.msra.mxu0 0.0
    %873 = vmatprep.subr.mxu0 0.0
    %874 = vmatpush1.msra.mxu0 0.0
    %875 = vmatprep.subr.mxu0 0.0
    %876 = vmatpush1.msra.mxu0 0.0
    %877 = vmatprep.subr.mxu0 0.0
    %878 = vmatpush1.msra.mxu0 0.0
    %879 = vmatprep.subr.mxu0 0.0
    %880 = vmatpush1.msra.mxu0 0.0
    %881 = vmatprep.mubr.f32.mxu0 0.0
    %882 = vmatmul.mubr.f32.gmra.mrb[0].mxu0 %v815
    %v883 = vpop.f32.mrb[0].mxu0
    %v884 = vadd.f32 %v582, %v883
    %v885 = vpop.f32.mrb[0].mxu0
    %886 = vdwg.mxu0
    %v887 = vtanh.pop %v884
    %s888 = scalar_lea.vmem [#allocation3], 8
    %v889 = vld [vmem:[%s888] sm:$0xff]
    %s890 = scalar_lea.vmem [#allocation4], 8
    %v891 = vld [vmem:[%s890] sm:$0xff]
    %v892 = vmul.f32 %v891, %v887
    %v893 = vadd.f32 %v889, %v892
    %s894 = scalar_lea.vmem [#allocation5], 8
    %895 = vst.msk [vmem:[%s894] sm:$0xff] %vm199, %v893
    %s896 = scalar_lea.vmem [#allocation2], 16
    %v897 = vld [vmem:[%s896] sm:$0xff]
    %v899 = vsel %vm199, %v893, 0
    %901 = vmatprep.subr.mxu0 0.0
    %902 = vmatpush1.msra.mxu0 %v32
    %903 = vmatprep.subr.mxu0 0.0
    %904 = vmatpush1.msra.mxu0 %v33
    %905 = vmatprep.subr.mxu0 0.0
    %906 = vmatpush1.msra.mxu0 %v34
    %907 = vmatprep.subr.mxu0 0.0
    %908 = vmatpush1.msra.mxu0 %v35
    %909 = vmatprep.subr.mxu0 0.0
    %910 = vmatpush1.msra.mxu0 0.0
    %911 = vmatprep.subr.mxu0 0.0
    %912 = vmatpush1.msra.mxu0 0.0
    %913 = vmatprep.subr.mxu0 0.0
    %914 = vmatpush1.msra.mxu0 0.0
    %915 = vmatprep.subr.mxu0 0.0
    %916 = vmatpush1.msra.mxu0 0.0
    %917 = vmatprep.subr.mxu0 0.0
    %918 = vmatpush1.msra.mxu0 0.0
    %919 = vmatprep.subr.mxu0 0.0
    %920 = vmatpush1.msra.mxu0 0.0
    %921 = vmatprep.subr.mxu0 0.0
    %922 = vmatpush1.msra.mxu0 0.0
    %923 = vmatprep.subr.mxu0 0.0
    %924 = vmatpush1.msra.mxu0 0.0
    %925 = vmatprep.subr.mxu0 0.0
    %926 = vmatpush1.msra.mxu0 0.0
    %927 = vmatprep.subr.mxu0 0.0
    %928 = vmatpush1.msra.mxu0 0.0
    %929 = vmatprep.subr.mxu0 0.0
    %930 = vmatpush1.msra.mxu0 0.0
    %931 = vmatprep.subr.mxu0 0.0
    %932 = vmatpush1.msra.mxu0 0.0
    %933 = vmatprep.subr.mxu0 0.0
    %934 = vmatpush1.msra.mxu0 0.0
    %935 = vmatprep.subr.mxu0 0.0
    %936 = vmatpush1.msra.mxu0 0.0
    %937 = vmatprep.subr.mxu0 0.0
    %938 = vmatpush1.msra.mxu0 0.0
    %939 = vmatprep.subr.mxu0 0.0
    %940 = vmatpush1.msra.mxu0 0.0
    %941 = vmatprep.subr.mxu0 0.0
    %942 = vmatpush1.msra.mxu0 0.0
    %943 = vmatprep.subr.mxu0 0.0
    %944 = vmatpush1.msra.mxu0 0.0
    %945 = vmatprep.subr.mxu0 0.0
    %946 = vmatpush1.msra.mxu0 0.0
    %947 = vmatprep.subr.mxu0 0.0
    %948 = vmatpush1.msra.mxu0 0.0
    %949 = vmatprep.subr.mxu0 0.0
    %950 = vmatpush1.msra.mxu0 0.0
    %951 = vmatprep.subr.mxu0 0.0
    %952 = vmatpush1.msra.mxu0 0.0
    %953 = vmatprep.subr.mxu0 0.0
    %954 = vmatpush1.msra.mxu0 0.0
    %955 = vmatprep.subr.mxu0 0.0
    %956 = vmatpush1.msra.mxu0 0.0
    %957 = vmatprep.subr.mxu0 0.0
    %958 = vmatpush1.msra.mxu0 0.0
    %959 = vmatprep.subr.mxu0 0.0
    %960 = vmatpush1.msra.mxu0 0.0
    %961 = vmatprep.subr.mxu0 0.0
    %962 = vmatpush1.msra.mxu0 0.0
    %963 = vmatprep.subr.mxu0 0.0
    %964 = vmatpush1.msra.mxu0 0.0
    %965 = vmatprep.mubr.f32.mxu0 0.0
    %966 = vmatmul.mubr.f32.gmra.mrb[0].mxu0 %v899
    %v967 = vpop.f32.mrb[0].mxu0
    %v968 = vadd.f32 %v897, %v967
    %v969 = vpop.f32.mrb[0].mxu0
    %970 = vdwg.mxu0
    %v971 = vtanh.pop %v968
    %v973 = vsel %vm199, %v971, 0
    %975 = vmatprep.subr.mxu0 0.0
    %976 = vmatpush1.msra.mxu0 %v36
    %977 = vmatprep.subr.mxu0 0.0
    %978 = vmatpush1.msra.mxu0 %v37
    %979 = vmatprep.subr.mxu0 0.0
    %980 = vmatpush1.msra.mxu0 %v38
    %981 = vmatprep.subr.mxu0 0.0
    %982 = vmatpush1.msra.mxu0 %v39
    %983 = vmatprep.subr.mxu0 0.0
    %984 = vmatpush1.msra.mxu0 0.0
    %985 = vmatprep.subr.mxu0 0.0
    %986 = vmatpush1.msra.mxu0 0.0
    %987 = vmatprep.subr.mxu0 0.0
    %988 = vmatpush1.msra.mxu0 0.0
    %989 = vmatprep.subr.mxu0 0.0
    %990 = vmatpush1.msra.mxu0 0.0
    %991 = vmatprep.subr.mxu0 0.0
    %992 = vmatpush1.msra.mxu0 0.0
    %993 = vmatprep.subr.mxu0 0.0
    %994 = vmatpush1.msra.mxu0 0.0
    %995 = vmatprep.subr.mxu0 0.0
    %996 = vmatpush1.msra.mxu0 0.0
    %997 = vmatprep.subr.mxu0 0.0
    %998 = vmatpush1.msra.mxu0 0.0
    %999 = vmatprep.subr.mxu0 0.0
    %1000 = vmatpush1.msra.mxu0 0.0
    %1001 = vmatprep.subr.mxu0 0.0
    %1002 = vmatpush1.msra.mxu0 0.0
    %1003 = vmatprep.subr.mxu0 0.0
    %1004 = vmatpush1.msra.mxu0 0.0
    %1005 = vmatprep.subr.mxu0 0.0
    %1006 = vmatpush1.msra.mxu0 0.0
    %1007 = vmatprep.subr.mxu0 0.0
    %1008 = vmatpush1.msra.mxu0 0.0
    %1009 = vmatprep.subr.mxu0 0.0
    %1010 = vmatpush1.msra.mxu0 0.0
    %1011 = vmatprep.subr.mxu0 0.0
    %1012 = vmatpush1.msra.mxu0 0.0
    %1013 = vmatprep.subr.mxu0 0.0
    %1014 = vmatpush1.msra.mxu0 0.0
    %1015 = vmatprep.subr.mxu0 0.0
    %1016 = vmatpush1.msra.mxu0 0.0
    %1017 = vmatprep.subr.mxu0 0.0
    %1018 = vmatpush1.msra.mxu0 0.0
    %1019 = vmatprep.subr.mxu0 0.0
    %1020 = vmatpush1.msra.mxu0 0.0
    %1021 = vmatprep.subr.mxu0 0.0
    %1022 = vmatpush1.msra.mxu0 0.0
    %1023 = vmatprep.subr.mxu0 0.0
    %1024 = vmatpush1.msra.mxu0 0.0
    %1025 = vmatprep.subr.mxu0 0.0
    %1026 = vmatpush1.msra.mxu0 0.0
    %1027 = vmatprep.subr.mxu0 0.0
    %1028 = vmatpush1.msra.mxu0 0.0
    %1029 = vmatprep.subr.mxu0 0.0
    %1030 = vmatpush1.msra.mxu0 0.0
    %1031 = vmatprep.subr.mxu0 0.0
    %1032 = vmatpush1.msra.mxu0 0.0
    %1033 = vmatprep.subr.mxu0 0.0
    %1034 = vmatpush1.msra.mxu0 0.0
    %1035 = vmatprep.subr.mxu0 0.0
    %1036 = vmatpush1.msra.mxu0 0.0
    %1037 = vmatprep.subr.mxu0 0.0
    %1038 = vmatpush1.msra.mxu0 0.0
    %1039 = vmatprep.mubr.f32.mxu0 0.0
    %1040 = vmatmul.mubr.f32.gmra.mrb[0].mxu0 %v973
    %v1041 = vpop.f32.mrb[0].mxu0
    %v1042 = vadd.f32 %v582, %v1041
    %v1043 = vpop.f32.mrb[0].mxu0
    %1044 = vdwg.mxu0
    %v1045 = vtanh.pop %v1042
    %s1046 = scalar_lea.vmem [#allocation3], 16
    %v1047 = vld [vmem:[%s1046] sm:$0xff]
    %s1048 = scalar_lea.vmem [#allocation4], 16
    %v1049 = vld [vmem:[%s1048] sm:$0xff]
    %v1050 = vmul.f32 %v1049, %v1045
    %v1051 = vadd.f32 %v1047, %v1050
    %s1052 = scalar_lea.vmem [#allocation5], 16
    %1053 = vst.msk [vmem:[%s1052] sm:$0xff] %vm199, %v1051
    %s1054 = scalar_lea.vmem [#allocation2], 24
    %v1055 = vld [vmem:[%s1054] sm:$0xff]
    %v1057 = vsel %vm199, %v1051, 0
    %1059 = vmatprep.subr.mxu0 0.0
    %1060 = vmatpush1.msra.mxu0 %v32
    %1061 = vmatprep.subr.mxu0 0.0
    %1062 = vmatpush1.msra.mxu0 %v33
    %1063 = vmatprep.subr.mxu0 0.0
    %1064 = vmatpush1.msra.mxu0 %v34
    %1065 = vmatprep.subr.mxu0 0.0
    %1066 = vmatpush1.msra.mxu0 %v35
    %1067 = vmatprep.subr.mxu0 0.0
    %1068 = vmatpush1.msra.mxu0 0.0
    %1069 = vmatprep.subr.mxu0 0.0
    %1070 = vmatpush1.msra.mxu0 0.0
    %1071 = vmatprep.subr.mxu0 0.0
    %1072 = vmatpush1.msra.mxu0 0.0
    %1073 = vmatprep.subr.mxu0 0.0
    %1074 = vmatpush1.msra.mxu0 0.0
    %1075 = vmatprep.subr.mxu0 0.0
    %1076 = vmatpush1.msra.mxu0 0.0
    %1077 = vmatprep.subr.mxu0 0.0
    %1078 = vmatpush1.msra.mxu0 0.0
    %1079 = vmatprep.subr.mxu0 0.0
    %1080 = vmatpush1.msra.mxu0 0.0
    %1081 = vmatprep.subr.mxu0 0.0
    %1082 = vmatpush1.msra.mxu0 0.0
    %1083 = vmatprep.subr.mxu0 0.0
    %1084 = vmatpush1.msra.mxu0 0.0
    %1085 = vmatprep.subr.mxu0 0.0
    %1086 = vmatpush1.msra.mxu0 0.0
    %1087 = vmatprep.subr.mxu0 0.0
    %1088 = vmatpush1.msra.mxu0 0.0
    %1089 = vmatprep.subr.mxu0 0.0
    %1090 = vmatpush1.msra.mxu0 0.0
    %1091 = vmatprep.subr.mxu0 0.0
    %1092 = vmatpush1.msra.mxu0 0.0
    %1093 = vmatprep.subr.mxu0 0.0
    %1094 = vmatpush1.msra.mxu0 0.0
    %1095 = vmatprep.subr.mxu0 0.0
    %1096 = vmatpush1.msra.mxu0 0.0
    %1097 = vmatprep.subr.mxu0 0.0
    %1098 = vmatpush1.msra.mxu0 0.0
    %1099 = vmatprep.subr.mxu0 0.0
    %1100 = vmatpush1.msra.mxu0 0.0
    %1101 = vmatprep.subr.mxu0 0.0
    %1102 = vmatpush1.msra.mxu0 0.0
    %1103 = vmatprep.subr.mxu0 0.0
    %1104 = vmatpush1.msra.mxu0 0.0
    %1105 = vmatprep.subr.mxu0 0.0
    %1106 = vmatpush1.msra.mxu0 0.0
    %1107 = vmatprep.subr.mxu0 0.0
    %1108 = vmatpush1.msra.mxu0 0.0
    %1109 = vmatprep.subr.mxu0 0.0
    %1110 = vmatpush1.msra.mxu0 0.0
    %1111 = vmatprep.subr.mxu0 0.0
    %1112 = vmatpush1.msra.mxu0 0.0
    %1113 = vmatprep.subr.mxu0 0.0
    %1114 = vmatpush1.msra.mxu0 0.0
    %1115 = vmatprep.subr.mxu0 0.0
    %1116 = vmatpush1.msra.mxu0 0.0
    %1117 = vmatprep.subr.mxu0 0.0
    %1118 = vmatpush1.msra.mxu0 0.0
    %1119 = vmatprep.subr.mxu0 0.0
    %1120 = vmatpush1.msra.mxu0 0.0
    %1121 = vmatprep.subr.mxu0 0.0
    %1122 = vmatpush1.msra.mxu0 0.0
    %1123 = vmatprep.mubr.f32.mxu0 0.0
    %1124 = vmatmul.mubr.f32.gmra.mrb[0].mxu0 %v1057
    %v1125 = vpop.f32.mrb[0].mxu0
    %v1126 = vadd.f32 %v1055, %v1125
    %v1127 = vpop.f32.mrb[0].mxu0
    %1128 = vdwg.mxu0
    %v1129 = vtanh.pop %v1126
    %v1131 = vsel %vm199, %v1129, 0
    %1133 = vmatprep.subr.mxu0 0.0
    %1134 = vmatpush1.msra.mxu0 %v36
    %1135 = vmatprep.subr.mxu0 0.0
    %1136 = vmatpush1.msra.mxu0 %v37
    %1137 = vmatprep.subr.mxu0 0.0
    %1138 = vmatpush1.msra.mxu0 %v38
    %1139 = vmatprep.subr.mxu0 0.0
    %1140 = vmatpush1.msra.mxu0 %v39
    %1141 = vmatprep.subr.mxu0 0.0
    %1142 = vmatpush1.msra.mxu0 0.0
    %1143 = vmatprep.subr.mxu0 0.0
    %1144 = vmatpush1.msra.mxu0 0.0
    %1145 = vmatprep.subr.mxu0 0.0
    %1146 = vmatpush1.msra.mxu0 0.0
    %1147 = vmatprep.subr.mxu0 0.0
    %1148 = vmatpush1.msra.mxu0 0.0
    %1149 = vmatprep.subr.mxu0 0.0
    %1150 = vmatpush1.msra.mxu0 0.0
    %1151 = vmatprep.subr.mxu0 0.0
    %1152 = vmatpush1.msra.mxu0 0.0
    %1153 = vmatprep.subr.mxu0 0.0
    %1154 = vmatpush1.msra.mxu0 0.0
    %1155 = vmatprep.subr.mxu0 0.0
    %1156 = vmatpush1.msra.mxu0 0.0
    %1157 = vmatprep.subr.mxu0 0.0
    %1158 = vmatpush1.msra.mxu0 0.0
    %1159 = vmatprep.subr.mxu0 0.0
    %1160 = vmatpush1.msra.mxu0 0.0
    %1161 = vmatprep.subr.mxu0 0.0
    %1162 = vmatpush1.msra.mxu0 0.0
    %1163 = vmatprep.subr.mxu0 0.0
    %1164 = vmatpush1.msra.mxu0 0.0
    %1165 = vmatprep.subr.mxu0 0.0
    %1166 = vmatpush1.msra.mxu0 0.0
    %1167 = vmatprep.subr.mxu0 0.0
    %1168 = vmatpush1.msra.mxu0 0.0
    %1169 = vmatprep.subr.mxu0 0.0
    %1170 = vmatpush1.msra.mxu0 0.0
    %1171 = vmatprep.subr.mxu0 0.0
    %1172 = vmatpush1.msra.mxu0 0.0
    %1173 = vmatprep.subr.mxu0 0.0
    %1174 = vmatpush1.msra.mxu0 0.0
    %1175 = vmatprep.subr.mxu0 0.0
    %1176 = vmatpush1.msra.mxu0 0.0
    %1177 = vmatprep.subr.mxu0 0.0
    %1178 = vmatpush1.msra.mxu0 0.0
    %1179 = vmatprep.subr.mxu0 0.0
    %1180 = vmatpush1.msra.mxu0 0.0
    %1181 = vmatprep.subr.mxu0 0.0
    %1182 = vmatpush1.msra.mxu0 0.0
    %1183 = vmatprep.subr.mxu0 0.0
    %1184 = vmatpush1.msra.mxu0 0.0
    %1185 = vmatprep.subr.mxu0 0.0
    %1186 = vmatpush1.msra.mxu0 0.0
    %1187 = vmatprep.subr.mxu0 0.0
    %1188 = vmatpush1.msra.mxu0 0.0
    %1189 = vmatprep.subr.mxu0 0.0
    %1190 = vmatpush1.msra.mxu0 0.0
    %1191 = vmatprep.subr.mxu0 0.0
    %1192 = vmatpush1.msra.mxu0 0.0
    %1193 = vmatprep.subr.mxu0 0.0
    %1194 = vmatpush1.msra.mxu0 0.0
    %1195 = vmatprep.subr.mxu0 0.0
    %1196 = vmatpush1.msra.mxu0 0.0
    %1197 = vmatprep.mubr.f32.mxu0 0.0
    %1198 = vmatmul.mubr.f32.gmra.mrb[0].mxu0 %v1131
    %v1199 = vpop.f32.mrb[0].mxu0
    %v1200 = vadd.f32 %v582, %v1199
    %v1201 = vpop.f32.mrb[0].mxu0
    %1202 = vdwg.mxu0
    %v1203 = vtanh.pop %v1200
    %s1204 = scalar_lea.vmem [#allocation3], 24
    %v1205 = vld [vmem:[%s1204] sm:$0xff]
    %s1206 = scalar_lea.vmem [#allocation4], 24
    %v1207 = vld [vmem:[%s1206] sm:$0xff]
    %v1208 = vmul.f32 %v1207, %v1203
    %v1209 = vadd.f32 %v1205, %v1208
    %s1210 = scalar_lea.vmem [#allocation5], 24
    %1211 = vst.msk [vmem:[%s1210] sm:$0xff] %vm199, %v1209
    %s1212 = scalar_lea.vmem [#allocation2], 32
    %v1213 = vld [vmem:[%s1212] sm:$0xff]
    %v1215 = vsel %vm199, %v1209, 0
    %1217 = vmatprep.subr.mxu0 0.0
    %1218 = vmatpush1.msra.mxu0 %v32
    %1219 = vmatprep.subr.mxu0 0.0
    %1220 = vmatpush1.msra.mxu0 %v33
    %1221 = vmatprep.subr.mxu0 0.0
    %1222 = vmatpush1.msra.mxu0 %v34
    %1223 = vmatprep.subr.mxu0 0.0
    %1224 = vmatpush1.msra.mxu0 %v35
    %1225 = vmatprep.subr.mxu0 0.0
    %1226 = vmatpush1.msra.mxu0 0.0
    %1227 = vmatprep.subr.mxu0 0.0
    %1228 = vmatpush1.msra.mxu0 0.0
    %1229 = vmatprep.subr.mxu0 0.0
    %1230 = vmatpush1.msra.mxu0 0.0
    %1231 = vmatprep.subr.mxu0 0.0
    %1232 = vmatpush1.msra.mxu0 0.0
    %1233 = vmatprep.subr.mxu0 0.0
    %1234 = vmatpush1.msra.mxu0 0.0
    %1235 = vmatprep.subr.mxu0 0.0
    %1236 = vmatpush1.msra.mxu0 0.0
    %1237 = vmatprep.subr.mxu0 0.0
    %1238 = vmatpush1.msra.mxu0 0.0
    %1239 = vmatprep.subr.mxu0 0.0
    %1240 = vmatpush1.msra.mxu0 0.0
    %1241 = vmatprep.subr.mxu0 0.0
    %1242 = vmatpush1.msra.mxu0 0.0
    %1243 = vmatprep.subr.mxu0 0.0
    %1244 = vmatpush1.msra.mxu0 0.0
    %1245 = vmatprep.subr.mxu0 0.0
    %1246 = vmatpush1.msra.mxu0 0.0
    %1247 = vmatprep.subr.mxu0 0.0
    %1248 = vmatpush1.msra.mxu0 0.0
    %1249 = vmatprep.subr.mxu0 0.0
    %1250 = vmatpush1.msra.mxu0 0.0
    %1251 = vmatprep.subr.mxu0 0.0
    %1252 = vmatpush1.msra.mxu0 0.0
    %1253 = vmatprep.subr.mxu0 0.0
    %1254 = vmatpush1.msra.mxu0 0.0
    %1255 = vmatprep.subr.mxu0 0.0
    %1256 = vmatpush1.msra.mxu0 0.0
    %1257 = vmatprep.subr.mxu0 0.0
    %1258 = vmatpush1.msra.mxu0 0.0
    %1259 = vmatprep.subr.mxu0 0.0
    %1260 = vmatpush1.msra.mxu0 0.0
    %1261 = vmatprep.subr.mxu0 0.0
    %1262 = vmatpush1.msra.mxu0 0.0
    %1263 = vmatprep.subr.mxu0 0.0
    %1264 = vmatpush1.msra.mxu0 0.0
    %1265 = vmatprep.subr.mxu0 0.0
    %1266 = vmatpush1.msra.mxu0 0.0
    %1267 = vmatprep.subr.mxu0 0.0
    %1268 = vmatpush1.msra.mxu0 0.0
    %1269 = vmatprep.subr.mxu0 0.0
    %1270 = vmatpush1.msra.mxu0 0.0
    %1271 = vmatprep.subr.mxu0 0.0
    %1272 = vmatpush1.msra.mxu0 0.0
    %1273 = vmatprep.subr.mxu0 0.0
    %1274 = vmatpush1.msra.mxu0 0.0
    %1275 = vmatprep.subr.mxu0 0.0
    %1276 = vmatpush1.msra.mxu0 0.0
    %1277 = vmatprep.subr.mxu0 0.0
    %1278 = vmatpush1.msra.mxu0 0.0
    %1279 = vmatprep.subr.mxu0 0.0
    %1280 = vmatpush1.msra.mxu0 0.0
    %1281 = vmatprep.mubr.f32.mxu0 0.0
    %1282 = vmatmul.mubr.f32.gmra.mrb[0].mxu0 %v1215
    %v1283 = vpop.f32.mrb[0].mxu0
    %v1284 = vadd.f32 %v1213, %v1283
    %v1285 = vpop.f32.mrb[0].mxu0
    %1286 = vdwg.mxu0
    %v1287 = vtanh.pop %v1284
    %v1289 = vsel %vm199, %v1287, 0
    %1291 = vmatprep.subr.mxu0 0.0
    %1292 = vmatpush1.msra.mxu0 %v36
    %1293 = vmatprep.subr.mxu0 0.0
    %1294 = vmatpush1.msra.mxu0 %v37
    %1295 = vmatprep.subr.mxu0 0.0
    %1296 = vmatpush1.msra.mxu0 %v38
    %1297 = vmatprep.subr.mxu0 0.0
    %1298 = vmatpush1.msra.mxu0 %v39
    %1299 = vmatprep.subr.mxu0 0.0
    %1300 = vmatpush1.msra.mxu0 0.0
    %1301 = vmatprep.subr.mxu0 0.0
    %1302 = vmatpush1.msra.mxu0 0.0
    %1303 = vmatprep.subr.mxu0 0.0
    %1304 = vmatpush1.msra.mxu0 0.0
    %1305 = vmatprep.subr.mxu0 0.0
    %1306 = vmatpush1.msra.mxu0 0.0
    %1307 = vmatprep.subr.mxu0 0.0
    %1308 = vmatpush1.msra.mxu0 0.0
    %1309 = vmatprep.subr.mxu0 0.0
    %1310 = vmatpush1.msra.mxu0 0.0
    %1311 = vmatprep.subr.mxu0 0.0
    %1312 = vmatpush1.msra.mxu0 0.0
    %1313 = vmatprep.subr.mxu0 0.0
    %1314 = vmatpush1.msra.mxu0 0.0
    %1315 = vmatprep.subr.mxu0 0.0
    %1316 = vmatpush1.msra.mxu0 0.0
    %1317 = vmatprep.subr.mxu0 0.0
    %1318 = vmatpush1.msra.mxu0 0.0
    %1319 = vmatprep.subr.mxu0 0.0
    %1320 = vmatpush1.msra.mxu0 0.0
    %1321 = vmatprep.subr.mxu0 0.0
    %1322 = vmatpush1.msra.mxu0 0.0
    %1323 = vmatprep.subr.mxu0 0.0
    %1324 = vmatpush1.msra.mxu0 0.0
    %1325 = vmatprep.subr.mxu0 0.0
    %1326 = vmatpush1.msra.mxu0 0.0
    %1327 = vmatprep.subr.mxu0 0.0
    %1328 = vmatpush1.msra.mxu0 0.0
    %1329 = vmatprep.subr.mxu0 0.0
    %1330 = vmatpush1.msra.mxu0 0.0
    %1331 = vmatprep.subr.mxu0 0.0
    %1332 = vmatpush1.msra.mxu0 0.0
    %1333 = vmatprep.subr.mxu0 0.0
    %1334 = vmatpush1.msra.mxu0 0.0
    %1335 = vmatprep.subr.mxu0 0.0
    %1336 = vmatpush1.msra.mxu0 0.0
    %1337 = vmatprep.subr.mxu0 0.0
    %1338 = vmatpush1.msra.mxu0 0.0
    %1339 = vmatprep.subr.mxu0 0.0
    %1340 = vmatpush1.msra.mxu0 0.0
    %1341 = vmatprep.subr.mxu0 0.0
    %1342 = vmatpush1.msra.mxu0 0.0
    %1343 = vmatprep.subr.mxu0 0.0
    %1344 = vmatpush1.msra.mxu0 0.0
    %1345 = vmatprep.subr.mxu0 0.0
    %1346 = vmatpush1.msra.mxu0 0.0
    %1347 = vmatprep.subr.mxu0 0.0
    %1348 = vmatpush1.msra.mxu0 0.0
    %1349 = vmatprep.subr.mxu0 0.0
    %1350 = vmatpush1.msra.mxu0 0.0
    %1351 = vmatprep.subr.mxu0 0.0
    %1352 = vmatpush1.msra.mxu0 0.0
    %1353 = vmatprep.subr.mxu0 0.0
    %1354 = vmatpush1.msra.mxu0 0.0
    %1355 = vmatprep.mubr.f32.mxu0 0.0
    %1356 = vmatmul.mubr.f32.gmra.mrb[0].mxu0 %v1289
    %v1357 = vpop.f32.mrb[0].mxu0
    %v1358 = vadd.f32 %v582, %v1357
    %v1359 = vpop.f32.mrb[0].mxu0
    %1360 = vdwg.mxu0
    %v1361 = vtanh.pop %v1358
    %s1362 = scalar_lea.vmem [#allocation3], 32
    %v1363 = vld [vmem:[%s1362] sm:$0xff]
    %s1364 = scalar_lea.vmem [#allocation4], 32
    %v1365 = vld [vmem:[%s1364] sm:$0xff]
    %v1366 = vmul.f32 %v1365, %v1361
    %v1367 = vadd.f32 %v1363, %v1366
    %s1368 = scalar_lea.vmem [#allocation5], 32
    %1369 = vst.msk [vmem:[%s1368] sm:$0xff] %vm199, %v1367
    %s1370 = scalar_lea.vmem [#allocation2], 40
    %v1371 = vld [vmem:[%s1370] sm:$0xff]
    %v1373 = vsel %vm199, %v1367, 0
    %1375 = vmatprep.subr.mxu0 0.0
    %1376 = vmatpush1.msra.mxu0 %v32
    %1377 = vmatprep.subr.mxu0 0.0
    %1378 = vmatpush1.msra.mxu0 %v33
    %1379 = vmatprep.subr.mxu0 0.0
    %1380 = vmatpush1.msra.mxu0 %v34
    %1381 = vmatprep.subr.mxu0 0.0
    %1382 = vmatpush1.msra.mxu0 %v35
    %1383 = vmatprep.subr.mxu0 0.0
    %1384 = vmatpush1.msra.mxu0 0.0
    %1385 = vmatprep.subr.mxu0 0.0
    %1386 = vmatpush1.msra.mxu0 0.0
    %1387 = vmatprep.subr.mxu0 0.0
    %1388 = vmatpush1.msra.mxu0 0.0
    %1389 = vmatprep.subr.mxu0 0.0
    %1390 = vmatpush1.msra.mxu0 0.0
    %1391 = vmatprep.subr.mxu0 0.0
    %1392 = vmatpush1.msra.mxu0 0.0
    %1393 = vmatprep.subr.mxu0 0.0
    %1394 = vmatpush1.msra.mxu0 0.0
    %1395 = vmatprep.subr.mxu0 0.0
    %1396 = vmatpush1.msra.mxu0 0.0
    %1397 = vmatprep.subr.mxu0 0.0
    %1398 = vmatpush1.msra.mxu0 0.0
    %1399 = vmatprep.subr.mxu0 0.0
    %1400 = vmatpush1.msra.mxu0 0.0
    %1401 = vmatprep.subr.mxu0 0.0
    %1402 = vmatpush1.msra.mxu0 0.0
    %1403 = vmatprep.subr.mxu0 0.0
    %1404 = vmatpush1.msra.mxu0 0.0
    %1405 = vmatprep.subr.mxu0 0.0
    %1406 = vmatpush1.msra.mxu0 0.0
    %1407 = vmatprep.subr.mxu0 0.0
    %1408 = vmatpush1.msra.mxu0 0.0
    %1409 = vmatprep.subr.mxu0 0.0
    %1410 = vmatpush1.msra.mxu0 0.0
    %1411 = vmatprep.subr.mxu0 0.0
    %1412 = vmatpush1.msra.mxu0 0.0
    %1413 = vmatprep.subr.mxu0 0.0
    %1414 = vmatpush1.msra.mxu0 0.0
    %1415 = vmatprep.subr.mxu0 0.0
    %1416 = vmatpush1.msra.mxu0 0.0
    %1417 = vmatprep.subr.mxu0 0.0
    %1418 = vmatpush1.msra.mxu0 0.0
    %1419 = vmatprep.subr.mxu0 0.0
    %1420 = vmatpush1.msra.mxu0 0.0
    %1421 = vmatprep.subr.mxu0 0.0
    %1422 = vmatpush1.msra.mxu0 0.0
    %1423 = vmatprep.subr.mxu0 0.0
    %1424 = vmatpush1.msra.mxu0 0.0
    %1425 = vmatprep.subr.mxu0 0.0
    %1426 = vmatpush1.msra.mxu0 0.0
    %1427 = vmatprep.subr.mxu0 0.0
    %1428 = vmatpush1.msra.mxu0 0.0
    %1429 = vmatprep.subr.mxu0 0.0
    %1430 = vmatpush1.msra.mxu0 0.0
    %1431 = vmatprep.subr.mxu0 0.0
    %1432 = vmatpush1.msra.mxu0 0.0
    %1433 = vmatprep.subr.mxu0 0.0
    %1434 = vmatpush1.msra.mxu0 0.0
    %1435 = vmatprep.subr.mxu0 0.0
    %1436 = vmatpush1.msra.mxu0 0.0
    %1437 = vmatprep.subr.mxu0 0.0
    %1438 = vmatpush1.msra.mxu0 0.0
    %1439 = vmatprep.mubr.f32.mxu0 0.0
    %1440 = vmatmul.mubr.f32.gmra.mrb[0].mxu0 %v1373
    %v1441 = vpop.f32.mrb[0].mxu0
    %v1442 = vadd.f32 %v1371, %v1441
    %v1443 = vpop.f32.mrb[0].mxu0
    %1444 = vdwg.mxu0
    %v1445 = vtanh.pop %v1442
    %v1447 = vsel %vm199, %v1445, 0
    %1449 = vmatprep.subr.mxu0 0.0
    %1450 = vmatpush1.msra.mxu0 %v36
    %1451 = vmatprep.subr.mxu0 0.0
    %1452 = vmatpush1.msra.mxu0 %v37
    %1453 = vmatprep.subr.mxu0 0.0
    %1454 = vmatpush1.msra.mxu0 %v38
    %1455 = vmatprep.subr.mxu0 0.0
    %1456 = vmatpush1.msra.mxu0 %v39
    %1457 = vmatprep.subr.mxu0 0.0
    %1458 = vmatpush1.msra.mxu0 0.0
    %1459 = vmatprep.subr.mxu0 0.0
    %1460 = vmatpush1.msra.mxu0 0.0
    %1461 = vmatprep.subr.mxu0 0.0
    %1462 = vmatpush1.msra.mxu0 0.0
    %1463 = vmatprep.subr.mxu0 0.0
    %1464 = vmatpush1.msra.mxu0 0.0
    %1465 = vmatprep.subr.mxu0 0.0
    %1466 = vmatpush1.msra.mxu0 0.0
    %1467 = vmatprep.subr.mxu0 0.0
    %1468 = vmatpush1.msra.mxu0 0.0
    %1469 = vmatprep.subr.mxu0 0.0
    %1470 = vmatpush1.msra.mxu0 0.0
    %1471 = vmatprep.subr.mxu0 0.0
    %1472 = vmatpush1.msra.mxu0 0.0
    %1473 = vmatprep.subr.mxu0 0.0
    %1474 = vmatpush1.msra.mxu0 0.0
    %1475 = vmatprep.subr.mxu0 0.0
    %1476 = vmatpush1.msra.mxu0 0.0
    %1477 = vmatprep.subr.mxu0 0.0
    %1478 = vmatpush1.msra.mxu0 0.0
    %1479 = vmatprep.subr.mxu0 0.0
    %1480 = vmatpush1.msra.mxu0 0.0
    %1481 = vmatprep.subr.mxu0 0.0
    %1482 = vmatpush1.msra.mxu0 0.0
    %1483 = vmatprep.subr.mxu0 0.0
    %1484 = vmatpush1.msra.mxu0 0.0
    %1485 = vmatprep.subr.mxu0 0.0
    %1486 = vmatpush1.msra.mxu0 0.0
    %1487 = vmatprep.subr.mxu0 0.0
    %1488 = vmatpush1.msra.mxu0 0.0
    %1489 = vmatprep.subr.mxu0 0.0
    %1490 = vmatpush1.msra.mxu0 0.0
    %1491 = vmatprep.subr.mxu0 0.0
    %1492 = vmatpush1.msra.mxu0 0.0
    %1493 = vmatprep.subr.mxu0 0.0
    %1494 = vmatpush1.msra.mxu0 0.0
    %1495 = vmatprep.subr.mxu0 0.0
    %1496 = vmatpush1.msra.mxu0 0.0
    %1497 = vmatprep.subr.mxu0 0.0
    %1498 = vmatpush1.msra.mxu0 0.0
    %1499 = vmatprep.subr.mxu0 0.0
    %1500 = vmatpush1.msra.mxu0 0.0
    %1501 = vmatprep.subr.mxu0 0.0
    %1502 = vmatpush1.msra.mxu0 0.0
    %1503 = vmatprep.subr.mxu0 0.0
    %1504 = vmatpush1.msra.mxu0 0.0
    %1505 = vmatprep.subr.mxu0 0.0
    %1506 = vmatpush1.msra.mxu0 0.0
    %1507 = vmatprep.subr.mxu0 0.0
    %1508 = vmatpush1.msra.mxu0 0.0
    %1509 = vmatprep.subr.mxu0 0.0
    %1510 = vmatpush1.msra.mxu0 0.0
    %1511 = vmatprep.subr.mxu0 0.0
    %1512 = vmatpush1.msra.mxu0 0.0
    %1513 = vmatprep.mubr.f32.mxu0 0.0
    %1514 = vmatmul.mubr.f32.gmra.mrb[0].mxu0 %v1447
    %v1515 = vpop.f32.mrb[0].mxu0
    %v1516 = vadd.f32 %v582, %v1515
    %v1517 = vpop.f32.mrb[0].mxu0
    %1518 = vdwg.mxu0
    %v1519 = vtanh.pop %v1516
    %s1520 = scalar_lea.vmem [#allocation3], 40
    %v1521 = vld [vmem:[%s1520] sm:$0xff]
    %s1522 = scalar_lea.vmem [#allocation4], 40
    %v1523 = vld [vmem:[%s1522] sm:$0xff]
    %v1524 = vmul.f32 %v1523, %v1519
    %v1525 = vadd.f32 %v1521, %v1524
    %s1526 = scalar_lea.vmem [#allocation5], 40
    %1527 = vst.msk [vmem:[%s1526] sm:$0xff] %vm199, %v1525
    %s1528 = scalar_lea.vmem [#allocation2], 48
    %v1529 = vld [vmem:[%s1528] sm:$0xff]
    %v1531 = vsel %vm199, %v1525, 0
    %1533 = vmatprep.subr.mxu0 0.0
    %1534 = vmatpush1.msra.mxu0 %v32
    %1535 = vmatprep.subr.mxu0 0.0
    %1536 = vmatpush1.msra.mxu0 %v33
    %1537 = vmatprep.subr.mxu0 0.0
    %1538 = vmatpush1.msra.mxu0 %v34
    %1539 = vmatprep.subr.mxu0 0.0
    %1540 = vmatpush1.msra.mxu0 %v35
    %1541 = vmatprep.subr.mxu0 0.0
    %1542 = vmatpush1.msra.mxu0 0.0
    %1543 = vmatprep.subr.mxu0 0.0
    %1544 = vmatpush1.msra.mxu0 0.0
    %1545 = vmatprep.subr.mxu0 0.0
    %1546 = vmatpush1.msra.mxu0 0.0
    %1547 = vmatprep.subr.mxu0 0.0
    %1548 = vmatpush1.msra.mxu0 0.0
    %1549 = vmatprep.subr.mxu0 0.0
    %1550 = vmatpush1.msra.mxu0 0.0
    %1551 = vmatprep.subr.mxu0 0.0
    %1552 = vmatpush1.msra.mxu0 0.0
    %1553 = vmatprep.subr.mxu0 0.0
    %1554 = vmatpush1.msra.mxu0 0.0
    %1555 = vmatprep.subr.mxu0 0.0
    %1556 = vmatpush1.msra.mxu0 0.0
    %1557 = vmatprep.subr.mxu0 0.0
    %1558 = vmatpush1.msra.mxu0 0.0
    %1559 = vmatprep.subr.mxu0 0.0
    %1560 = vmatpush1.msra.mxu0 0.0
    %1561 = vmatprep.subr.mxu0 0.0
    %1562 = vmatpush1.msra.mxu0 0.0
    %1563 = vmatprep.subr.mxu0 0.0
    %1564 = vmatpush1.msra.mxu0 0.0
    %1565 = vmatprep.subr.mxu0 0.0
    %1566 = vmatpush1.msra.mxu0 0.0
    %1567 = vmatprep.subr.mxu0 0.0
    %1568 = vmatpush1.msra.mxu0 0.0
    %1569 = vmatprep.subr.mxu0 0.0
    %1570 = vmatpush1.msra.mxu0 0.0
    %1571 = vmatprep.subr.mxu0 0.0
    %1572 = vmatpush1.msra.mxu0 0.0
    %1573 = vmatprep.subr.mxu0 0.0
    %1574 = vmatpush1.msra.mxu0 0.0
    %1575 = vmatprep.subr.mxu0 0.0
    %1576 = vmatpush1.msra.mxu0 0.0
    %1577 = vmatprep.subr.mxu0 0.0
    %1578 = vmatpush1.msra.mxu0 0.0
    %1579 = vmatprep.subr.mxu0 0.0
    %1580 = vmatpush1.msra.mxu0 0.0
    %1581 = vmatprep.subr.mxu0 0.0
    %1582 = vmatpush1.msra.mxu0 0.0
    %1583 = vmatprep.subr.mxu0 0.0
    %1584 = vmatpush1.msra.mxu0 0.0
    %1585 = vmatprep.subr.mxu0 0.0
    %1586 = vmatpush1.msra.mxu0 0.0
    %1587 = vmatprep.subr.mxu0 0.0
    %1588 = vmatpush1.msra.mxu0 0.0
    %1589 = vmatprep.subr.mxu0 0.0
    %1590 = vmatpush1.msra.mxu0 0.0
    %1591 = vmatprep.subr.mxu0 0.0
    %1592 = vmatpush1.msra.mxu0 0.0
    %1593 = vmatprep.subr.mxu0 0.0
    %1594 = vmatpush1.msra.mxu0 0.0
    %1595 = vmatprep.subr.mxu0 0.0
    %1596 = vmatpush1.msra.mxu0 0.0
    %1597 = vmatprep.mubr.f32.mxu0 0.0
    %1598 = vmatmul.mubr.f32.gmra.mrb[0].mxu0 %v1531
    %v1599 = vpop.f32.mrb[0].mxu0
    %v1600 = vadd.f32 %v1529, %v1599
    %v1601 = vpop.f32.mrb[0].mxu0
    %1602 = vdwg.mxu0
    %v1603 = vtanh.pop %v1600
    %v1605 = vsel %vm199, %v1603, 0
    %1607 = vmatprep.subr.mxu0 0.0
    %1608 = vmatpush1.msra.mxu0 %v36
    %1609 = vmatprep.subr.mxu0 0.0
    %1610 = vmatpush1.msra.mxu0 %v37
    %1611 = vmatprep.subr.mxu0 0.0
    %1612 = vmatpush1.msra.mxu0 %v38
    %1613 = vmatprep.subr.mxu0 0.0
    %1614 = vmatpush1.msra.mxu0 %v39
    %1615 = vmatprep.subr.mxu0 0.0
    %1616 = vmatpush1.msra.mxu0 0.0
    %1617 = vmatprep.subr.mxu0 0.0
    %1618 = vmatpush1.msra.mxu0 0.0
    %1619 = vmatprep.subr.mxu0 0.0
    %1620 = vmatpush1.msra.mxu0 0.0
    %1621 = vmatprep.subr.mxu0 0.0
    %1622 = vmatpush1.msra.mxu0 0.0
    %1623 = vmatprep.subr.mxu0 0.0
    %1624 = vmatpush1.msra.mxu0 0.0
    %1625 = vmatprep.subr.mxu0 0.0
    %1626 = vmatpush1.msra.mxu0 0.0
    %1627 = vmatprep.subr.mxu0 0.0
    %1628 = vmatpush1.msra.mxu0 0.0
    %1629 = vmatprep.subr.mxu0 0.0
    %1630 = vmatpush1.msra.mxu0 0.0
    %1631 = vmatprep.subr.mxu0 0.0
    %1632 = vmatpush1.msra.mxu0 0.0
    %1633 = vmatprep.subr.mxu0 0.0
    %1634 = vmatpush1.msra.mxu0 0.0
    %1635 = vmatprep.subr.mxu0 0.0
    %1636 = vmatpush1.msra.mxu0 0.0
    %1637 = vmatprep.subr.mxu0 0.0
    %1638 = vmatpush1.msra.mxu0 0.0
    %1639 = vmatprep.subr.mxu0 0.0
    %1640 = vmatpush1.msra.mxu0 0.0
    %1641 = vmatprep.subr.mxu0 0.0
    %1642 = vmatpush1.msra.mxu0 0.0
    %1643 = vmatprep.subr.mxu0 0.0
    %1644 = vmatpush1.msra.mxu0 0.0
    %1645 = vmatprep.subr.mxu0 0.0
    %1646 = vmatpush1.msra.mxu0 0.0
    %1647 = vmatprep.subr.mxu0 0.0
    %1648 = vmatpush1.msra.mxu0 0.0
    %1649 = vmatprep.subr.mxu0 0.0
    %1650 = vmatpush1.msra.mxu0 0.0
    %1651 = vmatprep.subr.mxu0 0.0
    %1652 = vmatpush1.msra.mxu0 0.0
    %1653 = vmatprep.subr.mxu0 0.0
    %1654 = vmatpush1.msra.mxu0 0.0
    %1655 = vmatprep.subr.mxu0 0.0
    %1656 = vmatpush1.msra.mxu0 0.0
    %1657 = vmatprep.subr.mxu0 0.0
    %1658 = vmatpush1.msra.mxu0 0.0
    %1659 = vmatprep.subr.mxu0 0.0
    %1660 = vmatpush1.msra.mxu0 0.0
    %1661 = vmatprep.subr.mxu0 0.0
    %1662 = vmatpush1.msra.mxu0 0.0
    %1663 = vmatprep.subr.mxu0 0.0
    %1664 = vmatpush1.msra.mxu0 0.0
    %1665 = vmatprep.subr.mxu0 0.0
    %1666 = vmatpush1.msra.mxu0 0.0
    %1667 = vmatprep.subr.mxu0 0.0
    %1668 = vmatpush1.msra.mxu0 0.0
    %1669 = vmatprep.subr.mxu0 0.0
    %1670 = vmatpush1.msra.mxu0 0.0
    %1671 = vmatprep.mubr.f32.mxu0 0.0
    %1672 = vmatmul.mubr.f32.gmra.mrb[0].mxu0 %v1605
    %v1673 = vpop.f32.mrb[0].mxu0
    %v1674 = vadd.f32 %v582, %v1673
    %v1675 = vpop.f32.mrb[0].mxu0
    %1676 = vdwg.mxu0
    %v1677 = vtanh.pop %v1674
    %s1678 = scalar_lea.vmem [#allocation3], 48
    %v1679 = vld [vmem:[%s1678] sm:$0xff]
    %s1680 = scalar_lea.vmem [#allocation4], 48
    %v1681 = vld [vmem:[%s1680] sm:$0xff]
    %v1682 = vmul.f32 %v1681, %v1677
    %v1683 = vadd.f32 %v1679, %v1682
    %s1684 = scalar_lea.vmem [#allocation5], 48
    %1685 = vst.msk [vmem:[%s1684] sm:$0xff] %vm199, %v1683
    %s1686 = scalar_lea.vmem [#allocation2], 56
    %v1687 = vld [vmem:[%s1686] sm:$0xff]
    %v1689 = vsel %vm199, %v1683, 0
    %1691 = vmatprep.subr.mxu0 0.0
    %1692 = vmatpush1.msra.mxu0 %v32
    %1693 = vmatprep.subr.mxu0 0.0
    %1694 = vmatpush1.msra.mxu0 %v33
    %1695 = vmatprep.subr.mxu0 0.0
    %1696 = vmatpush1.msra.mxu0 %v34
    %1697 = vmatprep.subr.mxu0 0.0
    %1698 = vmatpush1.msra.mxu0 %v35
    %1699 = vmatprep.subr.mxu0 0.0
    %1700 = vmatpush1.msra.mxu0 0.0
    %1701 = vmatprep.subr.mxu0 0.0
    %1702 = vmatpush1.msra.mxu0 0.0
    %1703 = vmatprep.subr.mxu0 0.0
    %1704 = vmatpush1.msra.mxu0 0.0
    %1705 = vmatprep.subr.mxu0 0.0
    %1706 = vmatpush1.msra.mxu0 0.0
    %1707 = vmatprep.subr.mxu0 0.0
    %1708 = vmatpush1.msra.mxu0 0.0
    %1709 = vmatprep.subr.mxu0 0.0
    %1710 = vmatpush1.msra.mxu0 0.0
    %1711 = vmatprep.subr.mxu0 0.0
    %1712 = vmatpush1.msra.mxu0 0.0
    %1713 = vmatprep.subr.mxu0 0.0
    %1714 = vmatpush1.msra.mxu0 0.0
    %1715 = vmatprep.subr.mxu0 0.0
    %1716 = vmatpush1.msra.mxu0 0.0
    %1717 = vmatprep.subr.mxu0 0.0
    %1718 = vmatpush1.msra.mxu0 0.0
    %1719 = vmatprep.subr.mxu0 0.0
    %1720 = vmatpush1.msra.mxu0 0.0
    %1721 = vmatprep.subr.mxu0 0.0
    %1722 = vmatpush1.msra.mxu0 0.0
    %1723 = vmatprep.subr.mxu0 0.0
    %1724 = vmatpush1.msra.mxu0 0.0
    %1725 = vmatprep.subr.mxu0 0.0
    %1726 = vmatpush1.msra.mxu0 0.0
    %1727 = vmatprep.subr.mxu0 0.0
    %1728 = vmatpush1.msra.mxu0 0.0
    %1729 = vmatprep.subr.mxu0 0.0
    %1730 = vmatpush1.msra.mxu0 0.0
    %1731 = vmatprep.subr.mxu0 0.0
    %1732 = vmatpush1.msra.mxu0 0.0
    %1733 = vmatprep.subr.mxu0 0.0
    %1734 = vmatpush1.msra.mxu0 0.0
    %1735 = vmatprep.subr.mxu0 0.0
    %1736 = vmatpush1.msra.mxu0 0.0
    %1737 = vmatprep.subr.mxu0 0.0
    %1738 = vmatpush1.msra.mxu0 0.0
    %1739 = vmatprep.subr.mxu0 0.0
    %1740 = vmatpush1.msra.mxu0 0.0
    %1741 = vmatprep.subr.mxu0 0.0
    %1742 = vmatpush1.msra.mxu0 0.0
    %1743 = vmatprep.subr.mxu0 0.0
    %1744 = vmatpush1.msra.mxu0 0.0
    %1745 = vmatprep.subr.mxu0 0.0
    %1746 = vmatpush1.msra.mxu0 0.0
    %1747 = vmatprep.subr.mxu0 0.0
    %1748 = vmatpush1.msra.mxu0 0.0
    %1749 = vmatprep.subr.mxu0 0.0
    %1750 = vmatpush1.msra.mxu0 0.0
    %1751 = vmatprep.subr.mxu0 0.0
    %1752 = vmatpush1.msra.mxu0 0.0
    %1753 = vmatprep.subr.mxu0 0.0
    %1754 = vmatpush1.msra.mxu0 0.0
    %1755 = vmatprep.mubr.f32.mxu0 0.0
    %1756 = vmatmul.mubr.f32.gmra.mrb[0].mxu0 %v1689
    %v1757 = vpop.f32.mrb[0].mxu0
    %v1758 = vadd.f32 %v1687, %v1757
    %v1759 = vpop.f32.mrb[0].mxu0
    %1760 = vdwg.mxu0
    %v1761 = vtanh.pop %v1758
    %v1763 = vsel %vm199, %v1761, 0
    %1765 = vmatprep.subr.mxu0 0.0
    %1766 = vmatpush1.msra.mxu0 %v36
    %1767 = vmatprep.subr.mxu0 0.0
    %1768 = vmatpush1.msra.mxu0 %v37
    %1769 = vmatprep.subr.mxu0 0.0
    %1770 = vmatpush1.msra.mxu0 %v38
    %1771 = vmatprep.subr.mxu0 0.0
    %1772 = vmatpush1.msra.mxu0 %v39
    %1773 = vmatprep.subr.mxu0 0.0
    %1774 = vmatpush1.msra.mxu0 0.0
    %1775 = vmatprep.subr.mxu0 0.0
    %1776 = vmatpush1.msra.mxu0 0.0
    %1777 = vmatprep.subr.mxu0 0.0
    %1778 = vmatpush1.msra.mxu0 0.0
    %1779 = vmatprep.subr.mxu0 0.0
    %1780 = vmatpush1.msra.mxu0 0.0
    %1781 = vmatprep.subr.mxu0 0.0
    %1782 = vmatpush1.msra.mxu0 0.0
    %1783 = vmatprep.subr.mxu0 0.0
    %1784 = vmatpush1.msra.mxu0 0.0
    %1785 = vmatprep.subr.mxu0 0.0
    %1786 = vmatpush1.msra.mxu0 0.0
    %1787 = vmatprep.subr.mxu0 0.0
    %1788 = vmatpush1.msra.mxu0 0.0
    %1789 = vmatprep.subr.mxu0 0.0
    %1790 = vmatpush1.msra.mxu0 0.0
    %1791 = vmatprep.subr.mxu0 0.0
    %1792 = vmatpush1.msra.mxu0 0.0
    %1793 = vmatprep.subr.mxu0 0.0
    %1794 = vmatpush1.msra.mxu0 0.0
    %1795 = vmatprep.subr.mxu0 0.0
    %1796 = vmatpush1.msra.mxu0 0.0
    %1797 = vmatprep.subr.mxu0 0.0
    %1798 = vmatpush1.msra.mxu0 0.0
    %1799 = vmatprep.subr.mxu0 0.0
    %1800 = vmatpush1.msra.mxu0 0.0
    %1801 = vmatprep.subr.mxu0 0.0
    %1802 = vmatpush1.msra.mxu0 0.0
    %1803 = vmatprep.subr.mxu0 0.0
    %1804 = vmatpush1.msra.mxu0 0.0
    %1805 = vmatprep.subr.mxu0 0.0
    %1806 = vmatpush1.msra.mxu0 0.0
    %1807 = vmatprep.subr.mxu0 0.0
    %1808 = vmatpush1.msra.mxu0 0.0
    %1809 = vmatprep.subr.mxu0 0.0
    %1810 = vmatpush1.msra.mxu0 0.0
    %1811 = vmatprep.subr.mxu0 0.0
    %1812 = vmatpush1.msra.mxu0 0.0
    %1813 = vmatprep.subr.mxu0 0.0
    %1814 = vmatpush1.msra.mxu0 0.0
    %1815 = vmatprep.subr.mxu0 0.0
    %1816 = vmatpush1.msra.mxu0 0.0
    %1817 = vmatprep.subr.mxu0 0.0
    %1818 = vmatpush1.msra.mxu0 0.0
    %1819 = vmatprep.subr.mxu0 0.0
    %1820 = vmatpush1.msra.mxu0 0.0
    %1821 = vmatprep.subr.mxu0 0.0
    %1822 = vmatpush1.msra.mxu0 0.0
    %1823 = vmatprep.subr.mxu0 0.0
    %1824 = vmatpush1.msra.mxu0 0.0
    %1825 = vmatprep.subr.mxu0 0.0
    %1826 = vmatpush1.msra.mxu0 0.0
    %1827 = vmatprep.subr.mxu0 0.0
    %1828 = vmatpush1.msra.mxu0 0.0
    %1829 = vmatprep.mubr.f32.mxu0 0.0
    %1830 = vmatmul.mubr.f32.gmra.mrb[0].mxu0 %v1763
    %v1831 = vpop.f32.mrb[0].mxu0
    %v1832 = vadd.f32 %v582, %v1831
    %v1833 = vpop.f32.mrb[0].mxu0
    %1834 = vdwg.mxu0
    %v1835 = vtanh.pop %v1832
    %s1836 = scalar_lea.vmem [#allocation3], 56
    %v1837 = vld [vmem:[%s1836] sm:$0xff]
    %s1838 = scalar_lea.vmem [#allocation4], 56
    %v1839 = vld [vmem:[%s1838] sm:$0xff]
    %v1840 = vmul.f32 %v1839, %v1835
    %v1841 = vadd.f32 %v1837, %v1840
    %s1842 = scalar_lea.vmem [#allocation5], 56
    %1843 = vst.msk [vmem:[%s1842] sm:$0xff] %vm199, %v1841
    // Predicated region
    $region26: #{tpu_custom_call.1} parent=1 // pred_check
      _
    $region27: #{tpu_custom_call.1} parent=1 // pred_check_branch
      %1845 = sbr.rel (0) target = $region29
    $region28: #{tpu_custom_call.1} parent=1 // pred_region
      %s1847 = ssub.s32 1024, 1024
      %1848 = vsyncadd [#allocation6], %s1847
      %s1849 = sshll.u32 [#allocation5], 4
      %s1850 = int_to_ptr.vmem [resolvable:$true] %s1849
      %1855 = dma.vmem_to_hbm [thread:$0]  %s1850, 1024, %s6, [#allocation6], 128, 128, 8
    $region29: #{tpu_custom_call.1} parent=1 // pred_fallthru
      _
    // Predicated region
    $region30: #{tpu_custom_call.1} parent=1 // pred_check
      _
    $region31: #{tpu_custom_call.1} parent=1 // pred_check_branch
      %1857 = sbr.rel (0) target = $region33
    $region32: #{tpu_custom_call.1} parent=1 // pred_region
      _
    $region33: #{tpu_custom_call.1} parent=1 // pred_fallthru
      _
    // Predicated region
    $region34: #{tpu_custom_call.1} parent=1 // pred_check
      _
    $region35: #{tpu_custom_call.1} parent=1 // pred_check_branch
      %1859 = sbr.rel (0) target = $region37
    $region36: #{tpu_custom_call.1} parent=1 // pred_region
      %1860 = dma.done [#allocation6], 1024
    $region37: #{tpu_custom_call.1} parent=1 // pred_fallthru
      _
    // Predicated region
    $region38: #{tpu_custom_call.1} parent=1 // pred_check
      _
    $region39: #{tpu_custom_call.1} parent=1 // pred_check_branch
      %1862 = sbr.rel (0) target = $region41
    $region40: #{tpu_custom_call.1} parent=1 // pred_region
      _
    $region41: #{tpu_custom_call.1} parent=1 // pred_fallthru
      _
    %1863 = vsyncpa [#allocation6], 1

</llo_original>
